<compile_context>
chip_gen: v7x
topology: tpu7x:2x2x1
jax: 0.10.0
libtpu: 0.0.40
codegen_flags: <defaults>
</compile_context>

<pallas_src>
import functools
import math

import jax
import jax.numpy as jnp
import numpy as np
from jax.experimental import pallas as pl
from jax.experimental.pallas import tpu as pltpu


def _dapev2_kernel(x_ref, col_ref, rowoff_ref, slopes_ref,
                   w1x_ref, w1a_ref, b1_ref, w2_ref, b2_ref,
                   o_ref, a_ref, ya_ref, *, seq_k, row_tile, ksize):
    pad = ksize // 2
    b = pl.program_id(1)                                   # batch (innermost axis)

    col = col_ref[...]                                     # (1, tile) i32 key index j
    row = rowoff_ref[...] + pl.program_id(0) * row_tile    # (1, tile) i32 query index i
    causal = col <= row                                    # tril mask

    # Hoisted tap-validity masks (conv zero padding along the key axis); reused
    # by both conv layers and by the cached alibi branch below.
    valid = [None] * ksize
    for t in range(ksize):
        d = t - pad
        if d != 0:
            valid[t] = (col + d >= 0) & (col + d < seq_k)

    def tap(v, t):
        """v shifted by (t - pad) along the key axis, zero outside each row."""
        d = t - pad
        if d == 0:
            return v
        c = v.shape[0]
        z = jnp.zeros((c, abs(d)), v.dtype)
        if d > 0:
            s = jnp.concatenate([v[:, d:], z], axis=1)
        else:
            s = jnp.concatenate([z, v[:, :d]], axis=1)
        return jnp.where(valid[t], s, 0.0)

    mm_dtype = w1x_ref.dtype

    def conv(w_ref, v, init):
        """(1,K) conv along the key axis as K accumulated MXU matmuls."""
        acc = init
        for t in range(ksize):
            acc = acc + jnp.dot(w_ref[t], tap(v, t).astype(mm_dtype),
                                preferred_element_type=jnp.float32)
        return acc

    # Batch-invariant half of the work: alibi bias and its conv1 contribution
    # (incl. conv1 bias). Computed once per tile at b == 0, reused for all B.
    @pl.when(b == 0)
    def _():
        rel = jnp.where(causal, col - row, 0).astype(jnp.float32)
        a = slopes_ref[...] * rel                          # (H, tile)
        a_ref[...] = a
        ya_ref[...] = conv(w1a_ref, a, 0.0) + b1_ref[...]  # (W, tile)

    x = x_ref[...].astype(jnp.float32)                     # (H, tile)
    xm = jnp.where(causal, x, 0.0)                         # tril(x)

    h = conv(w1x_ref, xm, ya_ref[...])                     # conv1 (2H -> W)
    h = jnp.where(h > 0, h, 0.01 * h)                      # LeakyReLU(0.01)
    y = conv(w2_ref, h, b2_ref[...])                       # conv2 (W -> H)

    o_ref[...] = (x + a_ref[...] + y).astype(o_ref.dtype)  # residual, downcast last


def _choose_tiling(seq_q, seq_k, heads, width, vmem_budget_bytes):
    """Rows per tile + (possibly padded) key extent, derived from a VMEM budget.

    Per-lane VMEM estimate (f32): double-buffered x/out blocks (4H), alibi and
    conv1-alibi scratch (H + W), conv intermediates / tap temps (~2H + 3W),
    plus ~30% headroom for compiler temps.
    """
    per_lane = 4.0 * (7 * heads + 4 * width + 8) * 1.3
    max_lanes = max(128, (int(vmem_budget_bytes / per_lane) // 128) * 128)

    def best_tr(sk):
        best = None
        for tr in range(1, seq_q + 1):
            if seq_q % tr:
                continue
            lanes = tr * sk
            if lanes > max_lanes:
                break
            if lanes % 128 == 0:
                best = tr                      # biggest lane-dense tile that fits
        return best

    tr = best_tr(seq_k)
    if tr is not None:
        return tr, seq_k
    # Pad the key axis to the next multiple of 128: keeps output stores lane
    # dense and the tile bounded (instead of a quadratic Sq*Sk fallback).
    skp = ((seq_k + 127) // 128) * 128
    tr = best_tr(skp)
    # TODO(synk): if even one padded row exceeds the VMEM budget, block the key
    # axis with an explicit halo instead of growing the tile.
    return (tr if tr is not None else 1), skp


def alibi_dapev2_forward(x, conv1_w, conv1_b, conv2_w, conv2_b, slopes,
                         *, vmem_budget_bytes=24 * 1024 * 1024,
                         matmul_dtype=jnp.float32):
    """x: (B, H, Sq, Sk) with Sq == Sk. Conv weights in PyTorch OIHW layout."""
    B, H, Sq, Sk = x.shape
    W = conv1_w.shape[0]
    K = conv1_w.shape[-1]
    assert conv1_w.shape == (W, 2 * H, 1, K) and conv2_w.shape == (H, W, 1, K)
    assert K % 2 == 1, "dapev2_kernel must be odd so the conv preserves seq_k"
    assert Sq == Sk, "only the training path (seq_q == seq_k) is implemented"
    # TODO(synk): decode path (seq_q == 1 with KV cache) selects a single alibi
    # row from the cached matrix; not implemented here.

    tr, Skp = _choose_tiling(Sq, Sk, H, W, vmem_budget_bytes)
    tile = tr * Skp
    if Skp != Sk:
        x = jnp.pad(x, ((0, 0), (0, 0), (0, 0), (0, Skp - Sk)))
    Mp = Sq * Skp
    num_tiles = Mp // tile

    # Free, contiguous reshape (no transpose): spatial dims flattened into lanes.
    x3 = x.reshape(B, H, Mp)

    # One-time, tiny host-side prep in the kernel's (tap, out, in) layout.
    w1 = conv1_w[:, :, 0, :]                                          # (W, 2H, K)
    w1x = jnp.transpose(w1[:, :H, :], (2, 0, 1)).astype(matmul_dtype)  # (K, W, H)
    w1a = jnp.transpose(w1[:, H:, :], (2, 0, 1)).astype(matmul_dtype)  # (K, W, H)
    w2m = jnp.transpose(conv2_w[:, :, 0, :], (2, 0, 1)).astype(matmul_dtype)  # (K, H, W)
    b1c = conv1_b.reshape(W, 1).astype(jnp.float32)
    b2c = conv2_b.reshape(H, 1).astype(jnp.float32)
    slopes_col = slopes.reshape(H, 1).astype(jnp.float32)
    col_idx = jnp.asarray(np.tile(np.arange(Skp, dtype=np.int32), tr)[None, :])
    row_off = jnp.asarray(np.repeat(np.arange(tr, dtype=np.int32), Skp)[None, :])

    kernel = functools.partial(_dapev2_kernel, seq_k=Sk, row_tile=tr, ksize=K)

    # Grid: tile axis outer ("parallel" -> v7x megacore splits tiles), batch
    # innermost ("arbitrary") so the VMEM scratch written at b == 0 is reused
    # by every batch of the same tile.
    out3 = pl.pallas_call(
        kernel,
        out_shape=jax.ShapeDtypeStruct((B, H, Mp), x.dtype),
        grid=(num_tiles, B),
        in_specs=[
            pl.BlockSpec((None, H, tile), lambda i, b: (b, 0, i)),     # x slab
            pl.BlockSpec((1, tile), lambda i, b: (0, 0)),              # key index j
            pl.BlockSpec((1, tile), lambda i, b: (0, 0)),              # row offset
            pl.BlockSpec((H, 1), lambda i, b: (0, 0)),                 # alibi slopes
            pl.BlockSpec((K, W, H), lambda i, b: (0, 0, 0)),           # conv1 w (x half)
            pl.BlockSpec((K, W, H), lambda i, b: (0, 0, 0)),           # conv1 w (alibi half)
            pl.BlockSpec((W, 1), lambda i, b: (0, 0)),                 # conv1 bias
            pl.BlockSpec((K, H, W), lambda i, b: (0, 0, 0)),           # conv2 weight
            pl.BlockSpec((H, 1), lambda i, b: (0, 0)),                 # conv2 bias
        ],
        out_specs=pl.BlockSpec((None, H, tile), lambda i, b: (b, 0, i)),
        scratch_shapes=[
            pltpu.VMEM((H, tile), jnp.float32),   # cached alibi bias a
            pltpu.VMEM((W, tile), jnp.float32),   # cached conv1(alibi) + bias
        ],
        compiler_params=pltpu.CompilerParams(
            dimension_semantics=("parallel", "arbitrary"),
            vmem_limit_bytes=32 * 1024 * 1024),
    )(x3, col_idx, row_off, slopes_col, w1x, w1a, b1c, w2m, b2c)

    out = out3.reshape(B, H, Sq, Skp)
    if Skp != Sk:
        out = out[..., :Sk]
    return out


def _alibi_slopes(n):
    """Same slope schedule as Alibi_DAPEV2._get_slopes (mp_size=1: all heads)."""
    def pow2(m):
        start = 2 ** (-(2 ** -(math.log2(m) - 3)))
        return [start * start ** i for i in range(m)]
    if math.log2(n).is_integer():
        return pow2(n)
    c = 2 ** math.floor(math.log2(n))
    return pow2(c) + _alibi_slopes(2 * c)[0::2][: n - c]


def _reference(x, conv1_w, conv1_b, conv2_w, conv2_b, slopes):
    """Pure-JAX reference of the PyTorch forward (seq_q == seq_k path)."""
    B, H, S, _ = x.shape
    K = conv1_w.shape[-1]
    i = jnp.arange(S)[:, None]
    j = jnp.arange(S)[None, :]
    causal = j <= i
    a = slopes[:, None, None] * jnp.where(causal, j - i, 0).astype(x.dtype)   # (H,S,S)
    xa = jnp.concatenate([x, jnp.broadcast_to(a, (B, H, S, S))], axis=1)
    xa = jnp.where(causal[None, None], xa, 0.0)
    dn = ("NCHW", "OIHW", "NCHW")
    pad = ((0, 0), (K // 2, K // 2))
    h = jax.lax.conv_general_dilated(xa, conv1_w, (1, 1), pad, dimension_numbers=dn,
                                     precision=jax.lax.Precision.HIGHEST)
    h = h + conv1_b[None, :, None, None]
    h = jnp.where(h > 0, h, 0.01 * h)
    y = jax.lax.conv_general_dilated(h, conv2_w, (1, 1), pad, dimension_numbers=dn,
                                     precision=jax.lax.Precision.HIGHEST)
    y = y + conv2_b[None, :, None, None]
    return x + a[None] + y


if __name__ == "__main__":
    # Small shapes consistent with the module:
    #   num_attention_heads = 4, mlp_width = 32, dapev2_kernel = 3,
    #   batch = 2, seq_len = 16  ->  x: (2, 4, 16, 16)
    B, HEADS, SEQ, MLP_W, KSIZE = 2, 4, 16, 32, 3

    key = jax.random.PRNGKey(0)
    kx, k1, k2, k3, k4 = jax.random.split(key, 5)

    x = jax.random.normal(kx, (B, HEADS, SEQ, SEQ), dtype=jnp.float32)

    # Deterministic PyTorch-Conv2d-style uniform init.
    bnd1 = 1.0 / np.sqrt(2 * HEADS * KSIZE)
    conv1_w = jax.random.uniform(k1, (MLP_W, 2 * HEADS, 1, KSIZE), jnp.float32, -bnd1, bnd1)
    conv1_b = jax.random.uniform(k2, (MLP_W,), jnp.float32, -bnd1, bnd1)
    bnd2 = 1.0 / np.sqrt(MLP_W * KSIZE)
    conv2_w = jax.random.uniform(k3, (HEADS, MLP_W, 1, KSIZE), jnp.float32, -bnd2, bnd2)
    conv2_b = jax.random.uniform(k4, (HEADS,), jnp.float32, -bnd2, bnd2)

    slopes = jnp.asarray(_alibi_slopes(HEADS), dtype=jnp.float32)

    out = alibi_dapev2_forward(x, conv1_w, conv1_b, conv2_w, conv2_b, slopes)
    out = jax.block_until_ready(out)

    ref = _reference(x, conv1_w, conv1_b, conv2_w, conv2_b, slopes)
    np.testing.assert_allclose(np.asarray(out), np.asarray(ref), rtol=1e-4, atol=1e-4)

    print("KERNEL_OK")
</pallas_src>

<mosaic_0001>
module attributes {stable_mosaic.version = 11 : i64} {
  func.func @_dapev2_kernel(%arg0: i32, %arg1: i32, %arg2: memref<1x4x256xf32, #tpu.memory_space<vmem>>, %arg3: memref<1x256xi32, #tpu.memory_space<vmem>>, %arg4: memref<1x256xi32, #tpu.memory_space<vmem>>, %arg5: memref<4x1xf32, #tpu.memory_space<vmem>>, %arg6: memref<3x32x4xf32, #tpu.memory_space<vmem>>, %arg7: memref<3x32x4xf32, #tpu.memory_space<vmem>>, %arg8: memref<32x1xf32, #tpu.memory_space<vmem>>, %arg9: memref<3x4x32xf32, #tpu.memory_space<vmem>>, %arg10: memref<4x1xf32, #tpu.memory_space<vmem>>, %arg11: memref<1x4x256xf32, #tpu.memory_space<vmem>>, %arg12: memref<4x256xf32, #tpu.memory_space<vmem>>, %arg13: memref<32x256xf32, #tpu.memory_space<vmem>>) attributes {dimension_semantics = [#tpu.dimension_semantics<parallel>, #tpu.dimension_semantics<arbitrary>], iteration_bounds = array<i64: 1, 2>, scalar_prefetch = 0 : i64, scratch_operands = 2 : i64, tpu.core_type = #tpu.core_type<tc>, window_params = [{transform_indices = @transform_0, window_bounds = array<i64: 1, 4, 256>}, {pipeline_mode = #tpu.pipeline_mode<synchronous>, transform_indices = @transform_1, window_bounds = array<i64: 1, 256>}, {pipeline_mode = #tpu.pipeline_mode<synchronous>, transform_indices = @transform_2, window_bounds = array<i64: 1, 256>}, {pipeline_mode = #tpu.pipeline_mode<synchronous>, transform_indices = @transform_3, window_bounds = array<i64: 4, 1>}, {pipeline_mode = #tpu.pipeline_mode<synchronous>, transform_indices = @transform_4, window_bounds = array<i64: 3, 32, 4>}, {pipeline_mode = #tpu.pipeline_mode<synchronous>, transform_indices = @transform_5, window_bounds = array<i64: 3, 32, 4>}, {pipeline_mode = #tpu.pipeline_mode<synchronous>, transform_indices = @transform_6, window_bounds = array<i64: 32, 1>}, {pipeline_mode = #tpu.pipeline_mode<synchronous>, transform_indices = @transform_7, window_bounds = array<i64: 3, 4, 32>}, {pipeline_mode = #tpu.pipeline_mode<synchronous>, transform_indices = @transform_8, window_bounds = array<i64: 4, 1>}, {transform_indices = @transform_9, window_bounds = array<i64: 1, 4, 256>}]} {
    %c0 = arith.constant 0 : index
    %c0_0 = arith.constant 0 : index
    %0 = vector.load %arg3[%c0, %c0_0] : memref<1x256xi32, #tpu.memory_space<vmem>>, vector<1x256xi32>
    %c0_1 = arith.constant 0 : index
    %c0_2 = arith.constant 0 : index
    %1 = vector.load %arg4[%c0_1, %c0_2] : memref<1x256xi32, #tpu.memory_space<vmem>>, vector<1x256xi32>
    %c16_i32 = arith.constant 16 : i32
    %2 = arith.muli %arg0, %c16_i32 : i32
    %3 = vector.broadcast %2 : i32 to vector<1x256xi32>
    %4 = arith.addi %1, %3 : vector<1x256xi32>
    %5 = arith.cmpi sle, %0, %4 : vector<1x256xi32>
    %c-1_i32 = arith.constant -1 : i32
    %6 = vector.broadcast %c-1_i32 : i32 to vector<1x256xi32>
    %7 = arith.addi %0, %6 : vector<1x256xi32>
    %c0_i32 = arith.constant 0 : i32
    %8 = vector.broadcast %c0_i32 : i32 to vector<1x256xi32>
    %9 = arith.cmpi sge, %7, %8 : vector<1x256xi32>
    %c-1_i32_3 = arith.constant -1 : i32
    %10 = vector.broadcast %c-1_i32_3 : i32 to vector<1x256xi32>
    %11 = arith.addi %0, %10 : vector<1x256xi32>
    %c16_i32_4 = arith.constant 16 : i32
    %12 = vector.broadcast %c16_i32_4 : i32 to vector<1x256xi32>
    %13 = arith.cmpi slt, %11, %12 : vector<1x256xi32>
    %14 = arith.andi %9, %13 : vector<1x256xi1>
    %c1_i32 = arith.constant 1 : i32
    %15 = vector.broadcast %c1_i32 : i32 to vector<1x256xi32>
    %16 = arith.addi %0, %15 : vector<1x256xi32>
    %c0_i32_5 = arith.constant 0 : i32
    %17 = vector.broadcast %c0_i32_5 : i32 to vector<1x256xi32>
    %18 = arith.cmpi sge, %16, %17 : vector<1x256xi32>
    %c1_i32_6 = arith.constant 1 : i32
    %19 = vector.broadcast %c1_i32_6 : i32 to vector<1x256xi32>
    %20 = arith.addi %0, %19 : vector<1x256xi32>
    %c16_i32_7 = arith.constant 16 : i32
    %21 = vector.broadcast %c16_i32_7 : i32 to vector<1x256xi32>
    %22 = arith.cmpi slt, %20, %21 : vector<1x256xi32>
    %23 = arith.andi %18, %22 : vector<1x256xi1>
    %c0_i32_8 = arith.constant 0 : i32
    %24 = arith.cmpi eq, %arg1, %c0_i32_8 : i32
    %25 = arith.extui %24 : i1 to i32
    %c0_i32_9 = arith.constant 0 : i32
    %26 = arith.cmpi ne, %25, %c0_i32_9 : i32
    scf.if %26 {
      %99 = arith.subi %0, %4 : vector<1x256xi32>
      %c0_i32_54 = arith.constant 0 : i32
      %100 = vector.broadcast %c0_i32_54 : i32 to vector<1x256xi32>
      %101 = arith.select %5, %99, %100 : vector<1x256xi1>, vector<1x256xi32>
      %102 = arith.sitofp %101 : vector<1x256xi32> to vector<1x256xf32>
      %c0_55 = arith.constant 0 : index
      %c0_56 = arith.constant 0 : index
      %103 = vector.load %arg5[%c0_55, %c0_56] : memref<4x1xf32, #tpu.memory_space<vmem>>, vector<4x1xf32>
      %104 = vector.broadcast %103 : vector<4x1xf32> to vector<4x256xf32>
      %105 = vector.broadcast %102 : vector<1x256xf32> to vector<4x256xf32>
      %106 = arith.mulf %104, %105 : vector<4x256xf32>
      %c0_57 = arith.constant 0 : index
      %c0_58 = arith.constant 0 : index
      %107 = vector.load %arg12[%c0_57, %c0_58] : memref<4x256xf32, #tpu.memory_space<vmem>>, vector<4x256xf32>
      tpu.vector_store %arg12[%c0_57, %c0_58], %106 {strides = array<i32>} : memref<4x256xf32, #tpu.memory_space<vmem>>, vector<4x256xf32>,
      %c0_59 = arith.constant 0 : index
      %c0_60 = arith.constant 0 : index
      %c0_61 = arith.constant 0 : index
      %108 = vector.load %arg7[%c0_59, %c0_60, %c0_61] : memref<3x32x4xf32, #tpu.memory_space<vmem>>, vector<1x32x4xf32>
      %109 = vector.shape_cast %108 : vector<1x32x4xf32> to vector<32x4xf32>
      %cst_62 = arith.constant 0.000000e+00 : f32
      %110 = vector.broadcast %cst_62 : f32 to vector<4x1xf32>
      %111 = vector.extract_strided_slice %106 {offsets = [0, 0], sizes = [4, 255], strides = [1, 1]} : vector<4x256xf32> to vector<4x255xf32>
      %112 = tpu.concatenate %110, %111 in 1 : vector<4x1xf32>, vector<4x255xf32> -> vector<4x256xf32>
      %cst_63 = arith.constant 0.000000e+00 : f32
      %113 = vector.shape_cast %14 : vector<1x256xi1> to vector<1x256xi1>
      %114 = vector.broadcast %113 : vector<1x256xi1> to vector<4x256xi1>
      %115 = vector.broadcast %cst_63 : f32 to vector<4x256xf32>
      %116 = arith.select %114, %112, %115 : vector<4x256xi1>, vector<4x256xf32>
      %cst_64 = arith.constant dense<0.000000e+00> : vector<32x256xf32>
      %117 = tpu.matmul %109, %116, %cst_64 {dimension_numbers = #tpu.dot_dimension_numbers<[1], [0], [0], [1], [0, 0, 1, 1], [], []>} : vector<32x4xf32>, vector<4x256xf32>, vector<32x256xf32> -> vector<32x256xf32>
      %cst_65 = arith.constant 0.000000e+00 : f32
      %118 = vector.broadcast %cst_65 : f32 to vector<32x256xf32>
      %119 = arith.addf %118, %117 : vector<32x256xf32>
      %c1_66 = arith.constant 1 : index
      %c0_67 = arith.constant 0 : index
      %c0_68 = arith.constant 0 : index
      %120 = vector.load %arg7[%c1_66, %c0_67, %c0_68] : memref<3x32x4xf32, #tpu.memory_space<vmem>>, vector<1x32x4xf32>
      %121 = vector.shape_cast %120 : vector<1x32x4xf32> to vector<32x4xf32>
      %cst_69 = arith.constant dense<0.000000e+00> : vector<32x256xf32>
      %122 = tpu.matmul %121, %106, %cst_69 {dimension_numbers = #tpu.dot_dimension_numbers<[1], [0], [0], [1], [0, 0, 1, 1], [], []>} : vector<32x4xf32>, vector<4x256xf32>, vector<32x256xf32> -> vector<32x256xf32>
      %123 = arith.addf %119, %122 : vector<32x256xf32>
      %c2_70 = arith.constant 2 : index
      %c0_71 = arith.constant 0 : index
      %c0_72 = arith.constant 0 : index
      %124 = vector.load %arg7[%c2_70, %c0_71, %c0_72] : memref<3x32x4xf32, #tpu.memory_space<vmem>>, vector<1x32x4xf32>
      %125 = vector.shape_cast %124 : vector<1x32x4xf32> to vector<32x4xf32>
      %cst_73 = arith.constant 0.000000e+00 : f32
      %126 = vector.broadcast %cst_73 : f32 to vector<4x1xf32>
      %127 = vector.extract_strided_slice %106 {offsets = [0, 1], sizes = [4, 255], strides = [1, 1]} : vector<4x256xf32> to vector<4x255xf32>
      %128 = tpu.concatenate %127, %126 in 1 : vector<4x255xf32>, vector<4x1xf32> -> vector<4x256xf32>
      %cst_74 = arith.constant 0.000000e+00 : f32
      %129 = vector.shape_cast %23 : vector<1x256xi1> to vector<1x256xi1>
      %130 = vector.broadcast %129 : vector<1x256xi1> to vector<4x256xi1>
      %131 = vector.broadcast %cst_74 : f32 to vector<4x256xf32>
      %132 = arith.select %130, %128, %131 : vector<4x256xi1>, vector<4x256xf32>
      %cst_75 = arith.constant dense<0.000000e+00> : vector<32x256xf32>
      %133 = tpu.matmul %125, %132, %cst_75 {dimension_numbers = #tpu.dot_dimension_numbers<[1], [0], [0], [1], [0, 0, 1, 1], [], []>} : vector<32x4xf32>, vector<4x256xf32>, vector<32x256xf32> -> vector<32x256xf32>
      %134 = arith.addf %123, %133 : vector<32x256xf32>
      %c0_76 = arith.constant 0 : index
      %c0_77 = arith.constant 0 : index
      %135 = vector.load %arg8[%c0_76, %c0_77] : memref<32x1xf32, #tpu.memory_space<vmem>>, vector<32x1xf32>
      %136 = vector.broadcast %135 : vector<32x1xf32> to vector<32x256xf32>
      %137 = arith.addf %134, %136 : vector<32x256xf32>
      %c0_78 = arith.constant 0 : index
      %c0_79 = arith.constant 0 : index
      %138 = vector.load %arg13[%c0_78, %c0_79] : memref<32x256xf32, #tpu.memory_space<vmem>>, vector<32x256xf32>
      tpu.vector_store %arg13[%c0_78, %c0_79], %137 {strides = array<i32>} : memref<32x256xf32, #tpu.memory_space<vmem>>, vector<32x256xf32>,
    } else {
    }
    %c0_10 = arith.constant 0 : index
    %c0_11 = arith.constant 0 : index
    %c0_12 = arith.constant 0 : index
    %27 = vector.load %arg2[%c0_10, %c0_11, %c0_12] : memref<1x4x256xf32, #tpu.memory_space<vmem>>, vector<1x4x256xf32>
    %28 = vector.shape_cast %27 : vector<1x4x256xf32> to vector<4x256xf32>
    %cst = arith.constant 0.000000e+00 : f32
    %29 = vector.shape_cast %5 : vector<1x256xi1> to vector<1x256xi1>
    %30 = vector.broadcast %29 : vector<1x256xi1> to vector<4x256xi1>
    %31 = vector.broadcast %cst : f32 to vector<4x256xf32>
    %32 = arith.select %30, %28, %31 : vector<4x256xi1>, vector<4x256xf32>
    %c0_13 = arith.constant 0 : index
    %c0_14 = arith.constant 0 : index
    %33 = vector.load %arg13[%c0_13, %c0_14] : memref<32x256xf32, #tpu.memory_space<vmem>>, vector<32x256xf32>
    %c0_15 = arith.constant 0 : index
    %c0_16 = arith.constant 0 : index
    %c0_17 = arith.constant 0 : index
    %34 = vector.load %arg6[%c0_15, %c0_16, %c0_17] : memref<3x32x4xf32, #tpu.memory_space<vmem>>, vector<1x32x4xf32>
    %35 = vector.shape_cast %34 : vector<1x32x4xf32> to vector<32x4xf32>
    %cst_18 = arith.constant 0.000000e+00 : f32
    %36 = vector.broadcast %cst_18 : f32 to vector<4x1xf32>
    %37 = vector.extract_strided_slice %32 {offsets = [0, 0], sizes = [4, 255], strides = [1, 1]} : vector<4x256xf32> to vector<4x255xf32>
    %38 = tpu.concatenate %36, %37 in 1 : vector<4x1xf32>, vector<4x255xf32> -> vector<4x256xf32>
    %cst_19 = arith.constant 0.000000e+00 : f32
    %39 = vector.shape_cast %14 : vector<1x256xi1> to vector<1x256xi1>
    %40 = vector.broadcast %39 : vector<1x256xi1> to vector<4x256xi1>
    %41 = vector.broadcast %cst_19 : f32 to vector<4x256xf32>
    %42 = arith.select %40, %38, %41 : vector<4x256xi1>, vector<4x256xf32>
    %cst_20 = arith.constant dense<0.000000e+00> : vector<32x256xf32>
    %43 = tpu.matmul %35, %42, %cst_20 {dimension_numbers = #tpu.dot_dimension_numbers<[1], [0], [0], [1], [0, 0, 1, 1], [], []>} : vector<32x4xf32>, vector<4x256xf32>, vector<32x256xf32> -> vector<32x256xf32>
    %44 = arith.addf %33, %43 : vector<32x256xf32>
    %c1 = arith.constant 1 : index
    %c0_21 = arith.constant 0 : index
    %c0_22 = arith.constant 0 : index
    %45 = vector.load %arg6[%c1, %c0_21, %c0_22] : memref<3x32x4xf32, #tpu.memory_space<vmem>>, vector<1x32x4xf32>
    %46 = vector.shape_cast %45 : vector<1x32x4xf32> to vector<32x4xf32>
    %cst_23 = arith.constant dense<0.000000e+00> : vector<32x256xf32>
    %47 = tpu.matmul %46, %32, %cst_23 {dimension_numbers = #tpu.dot_dimension_numbers<[1], [0], [0], [1], [0, 0, 1, 1], [], []>} : vector<32x4xf32>, vector<4x256xf32>, vector<32x256xf32> -> vector<32x256xf32>
    %48 = arith.addf %44, %47 : vector<32x256xf32>
    %c2 = arith.constant 2 : index
    %c0_24 = arith.constant 0 : index
    %c0_25 = arith.constant 0 : index
    %49 = vector.load %arg6[%c2, %c0_24, %c0_25] : memref<3x32x4xf32, #tpu.memory_space<vmem>>, vector<1x32x4xf32>
    %50 = vector.shape_cast %49 : vector<1x32x4xf32> to vector<32x4xf32>
    %cst_26 = arith.constant 0.000000e+00 : f32
    %51 = vector.broadcast %cst_26 : f32 to vector<4x1xf32>
    %52 = vector.extract_strided_slice %32 {offsets = [0, 1], sizes = [4, 255], strides = [1, 1]} : vector<4x256xf32> to vector<4x255xf32>
    %53 = tpu.concatenate %52, %51 in 1 : vector<4x255xf32>, vector<4x1xf32> -> vector<4x256xf32>
    %cst_27 = arith.constant 0.000000e+00 : f32
    %54 = vector.shape_cast %23 : vector<1x256xi1> to vector<1x256xi1>
    %55 = vector.broadcast %54 : vector<1x256xi1> to vector<4x256xi1>
    %56 = vector.broadcast %cst_27 : f32 to vector<4x256xf32>
    %57 = arith.select %55, %53, %56 : vector<4x256xi1>, vector<4x256xf32>
    %cst_28 = arith.constant dense<0.000000e+00> : vector<32x256xf32>
    %58 = tpu.matmul %50, %57, %cst_28 {dimension_numbers = #tpu.dot_dimension_numbers<[1], [0], [0], [1], [0, 0, 1, 1], [], []>} : vector<32x4xf32>, vector<4x256xf32>, vector<32x256xf32> -> vector<32x256xf32>
    %59 = arith.addf %48, %58 : vector<32x256xf32>
    %cst_29 = arith.constant 0.000000e+00 : f32
    %60 = vector.broadcast %cst_29 : f32 to vector<32x256xf32>
    %61 = arith.cmpf ogt, %59, %60 : vector<32x256xf32>
    %cst_30 = arith.constant 0.00999999977 : f32
    %62 = vector.broadcast %cst_30 : f32 to vector<32x256xf32>
    %63 = arith.mulf %62, %59 : vector<32x256xf32>
    %64 = arith.select %61, %59, %63 : vector<32x256xi1>, vector<32x256xf32>
    %c0_31 = arith.constant 0 : index
    %c0_32 = arith.constant 0 : index
    %65 = vector.load %arg10[%c0_31, %c0_32] : memref<4x1xf32, #tpu.memory_space<vmem>>, vector<4x1xf32>
    %c0_33 = arith.constant 0 : index
    %c0_34 = arith.constant 0 : index
    %c0_35 = arith.constant 0 : index
    %66 = vector.load %arg9[%c0_33, %c0_34, %c0_35] : memref<3x4x32xf32, #tpu.memory_space<vmem>>, vector<1x4x32xf32>
    %67 = vector.shape_cast %66 : vector<1x4x32xf32> to vector<4x32xf32>
    %cst_36 = arith.constant 0.000000e+00 : f32
    %68 = vector.broadcast %cst_36 : f32 to vector<32x1xf32>
    %69 = vector.extract_strided_slice %64 {offsets = [0, 0], sizes = [32, 255], strides = [1, 1]} : vector<32x256xf32> to vector<32x255xf32>
    %70 = tpu.concatenate %68, %69 in 1 : vector<32x1xf32>, vector<32x255xf32> -> vector<32x256xf32>
    %cst_37 = arith.constant 0.000000e+00 : f32
    %71 = vector.shape_cast %14 : vector<1x256xi1> to vector<1x256xi1>
    %72 = vector.broadcast %71 : vector<1x256xi1> to vector<32x256xi1>
    %73 = vector.broadcast %cst_37 : f32 to vector<32x256xf32>
    %74 = arith.select %72, %70, %73 : vector<32x256xi1>, vector<32x256xf32>
    %cst_38 = arith.constant dense<0.000000e+00> : vector<4x256xf32>
    %75 = tpu.matmul %67, %74, %cst_38 {dimension_numbers = #tpu.dot_dimension_numbers<[1], [0], [0], [1], [0, 0, 1, 1], [], []>} : vector<4x32xf32>, vector<32x256xf32>, vector<4x256xf32> -> vector<4x256xf32>
    %76 = vector.broadcast %65 : vector<4x1xf32> to vector<4x256xf32>
    %77 = arith.addf %76, %75 : vector<4x256xf32>
    %c1_39 = arith.constant 1 : index
    %c0_40 = arith.constant 0 : index
    %c0_41 = arith.constant 0 : index
    %78 = vector.load %arg9[%c1_39, %c0_40, %c0_41] : memref<3x4x32xf32, #tpu.memory_space<vmem>>, vector<1x4x32xf32>
    %79 = vector.shape_cast %78 : vector<1x4x32xf32> to vector<4x32xf32>
    %cst_42 = arith.constant dense<0.000000e+00> : vector<4x256xf32>
    %80 = tpu.matmul %79, %64, %cst_42 {dimension_numbers = #tpu.dot_dimension_numbers<[1], [0], [0], [1], [0, 0, 1, 1], [], []>} : vector<4x32xf32>, vector<32x256xf32>, vector<4x256xf32> -> vector<4x256xf32>
    %81 = arith.addf %77, %80 : vector<4x256xf32>
    %c2_43 = arith.constant 2 : index
    %c0_44 = arith.constant 0 : index
    %c0_45 = arith.constant 0 : index
    %82 = vector.load %arg9[%c2_43, %c0_44, %c0_45] : memref<3x4x32xf32, #tpu.memory_space<vmem>>, vector<1x4x32xf32>
    %83 = vector.shape_cast %82 : vector<1x4x32xf32> to vector<4x32xf32>
    %cst_46 = arith.constant 0.000000e+00 : f32
    %84 = vector.broadcast %cst_46 : f32 to vector<32x1xf32>
    %85 = vector.extract_strided_slice %64 {offsets = [0, 1], sizes = [32, 255], strides = [1, 1]} : vector<32x256xf32> to vector<32x255xf32>
    %86 = tpu.concatenate %85, %84 in 1 : vector<32x255xf32>, vector<32x1xf32> -> vector<32x256xf32>
    %cst_47 = arith.constant 0.000000e+00 : f32
    %87 = vector.shape_cast %23 : vector<1x256xi1> to vector<1x256xi1>
    %88 = vector.broadcast %87 : vector<1x256xi1> to vector<32x256xi1>
    %89 = vector.broadcast %cst_47 : f32 to vector<32x256xf32>
    %90 = arith.select %88, %86, %89 : vector<32x256xi1>, vector<32x256xf32>
    %cst_48 = arith.constant dense<0.000000e+00> : vector<4x256xf32>
    %91 = tpu.matmul %83, %90, %cst_48 {dimension_numbers = #tpu.dot_dimension_numbers<[1], [0], [0], [1], [0, 0, 1, 1], [], []>} : vector<4x32xf32>, vector<32x256xf32>, vector<4x256xf32> -> vector<4x256xf32>
    %92 = arith.addf %81, %91 : vector<4x256xf32>
    %c0_49 = arith.constant 0 : index
    %c0_50 = arith.constant 0 : index
    %93 = vector.load %arg12[%c0_49, %c0_50] : memref<4x256xf32, #tpu.memory_space<vmem>>, vector<4x256xf32>
    %94 = arith.addf %28, %93 : vector<4x256xf32>
    %95 = arith.addf %94, %92 : vector<4x256xf32>
    %c0_51 = arith.constant 0 : index
    %c0_52 = arith.constant 0 : index
    %c0_53 = arith.constant 0 : index
    %96 = vector.load %arg11[%c0_51, %c0_52, %c0_53] : memref<1x4x256xf32, #tpu.memory_space<vmem>>, vector<1x4x256xf32>
    %97 = vector.shape_cast %96 : vector<1x4x256xf32> to vector<4x256xf32>
    %98 = vector.shape_cast %95 : vector<4x256xf32> to vector<1x4x256xf32>
    tpu.vector_store %arg11[%c0_51, %c0_52, %c0_53], %98 {strides = array<i32>} : memref<1x4x256xf32, #tpu.memory_space<vmem>>, vector<1x4x256xf32>,
    return
  }
  func.func @transform_0(%arg0: i32, %arg1: i32) -> (i32, i32, i32) {
    %c0_i32 = arith.constant 0 : i32
    %c0_i32_0 = arith.constant 0 : i32
    return %arg1, %c0_i32, %arg0 : i32, i32, i32
  }
  func.func @transform_1(%arg0: i32, %arg1: i32) -> (i32, i32) {
    %c0_i32 = arith.constant 0 : i32
    %c0_i32_0 = arith.constant 0 : i32
    %c0_i32_1 = arith.constant 0 : i32
    return %c0_i32, %c0_i32_0 : i32, i32
  }
  func.func @transform_2(%arg0: i32, %arg1: i32) -> (i32, i32) {
    %c0_i32 = arith.constant 0 : i32
    %c0_i32_0 = arith.constant 0 : i32
    %c0_i32_1 = arith.constant 0 : i32
    return %c0_i32, %c0_i32_0 : i32, i32
  }
  func.func @transform_3(%arg0: i32, %arg1: i32) -> (i32, i32) {
    %c0_i32 = arith.constant 0 : i32
    %c0_i32_0 = arith.constant 0 : i32
    %c0_i32_1 = arith.constant 0 : i32
    return %c0_i32, %c0_i32_0 : i32, i32
  }
  func.func @transform_4(%arg0: i32, %arg1: i32) -> (i32, i32, i32) {
    %c0_i32 = arith.constant 0 : i32
    %c0_i32_0 = arith.constant 0 : i32
    %c0_i32_1 = arith.constant 0 : i32
    %c0_i32_2 = arith.constant 0 : i32
    return %c0_i32, %c0_i32_0, %c0_i32_1 : i32, i32, i32
  }
  func.func @transform_5(%arg0: i32, %arg1: i32) -> (i32, i32, i32) {
    %c0_i32 = arith.constant 0 : i32
    %c0_i32_0 = arith.constant 0 : i32
    %c0_i32_1 = arith.constant 0 : i32
    %c0_i32_2 = arith.constant 0 : i32
    return %c0_i32, %c0_i32_0, %c0_i32_1 : i32, i32, i32
  }
  func.func @transform_6(%arg0: i32, %arg1: i32) -> (i32, i32) {
    %c0_i32 = arith.constant 0 : i32
    %c0_i32_0 = arith.constant 0 : i32
    %c0_i32_1 = arith.constant 0 : i32
    return %c0_i32, %c0_i32_0 : i32, i32
  }
  func.func @transform_7(%arg0: i32, %arg1: i32) -> (i32, i32, i32) {
    %c0_i32 = arith.constant 0 : i32
    %c0_i32_0 = arith.constant 0 : i32
    %c0_i32_1 = arith.constant 0 : i32
    %c0_i32_2 = arith.constant 0 : i32
    return %c0_i32, %c0_i32_0, %c0_i32_1 : i32, i32, i32
  }
  func.func @transform_8(%arg0: i32, %arg1: i32) -> (i32, i32) {
    %c0_i32 = arith.constant 0 : i32
    %c0_i32_0 = arith.constant 0 : i32
    %c0_i32_1 = arith.constant 0 : i32
    return %c0_i32, %c0_i32_0 : i32, i32
  }
  func.func @transform_9(%arg0: i32, %arg1: i32) -> (i32, i32, i32) {
    %c0_i32 = arith.constant 0 : i32
    %c0_i32_0 = arith.constant 0 : i32
    return %arg1, %c0_i32, %arg0 : i32, i32, i32
  }
}

</mosaic_0001>

<llo_original>
// kernel: tpu_custom_call.1
$region0: #{tpu_custom_call.1}
  #allocation0 [shape = 'u32[]', space=smem, size = 0x4, offset = 0x4, fixed_abs, tag = 'smem constant byte address 0x4 - core index']
  #allocation1 [shape = 'u32[144,128]{1,0:T(1,128)}', space=vmem, size = 0x12000, scoped, tag = 'internal scratch']
  #allocation2 [shape = 'f32[4,256]{1,0:T(4,128)}', space=vmem, size = 0x1000, scoped, tag = 'scratch operand']
  #allocation3 [shape = 'f32[32,256]{1,0:T(8,128)}', space=vmem, size = 0x8000, scoped, tag = 'scratch operand']
  %s0 = inlined_call_operand.vmem [shape: f32[2,4,256], index: 0, kind: input, shape index: {}]
  %s1 = inlined_call_operand.vmem [shape: s32[1,256], index: 1, kind: input, shape index: {}]
  %s2 = inlined_call_operand.vmem [shape: s32[1,256], index: 2, kind: input, shape index: {}]
  %s3 = inlined_call_operand.vmem [shape: f32[4,1], index: 3, kind: input, shape index: {}]
  %s4 = inlined_call_operand.vmem [shape: f32[3,32,4], index: 4, kind: input, shape index: {}]
  %s5 = inlined_call_operand.vmem [shape: f32[3,32,4], index: 5, kind: input, shape index: {}]
  %s6 = inlined_call_operand.vmem [shape: f32[32,1], index: 6, kind: input, shape index: {}]
  %s7 = inlined_call_operand.vmem [shape: f32[3,4,32], index: 7, kind: input, shape index: {}]
  %s8 = inlined_call_operand.vmem [shape: f32[4,1], index: 8, kind: input, shape index: {}]
  %s9 = inlined_call_operand.hbm [shape: f32[2,4,256], index: 9, kind: output, shape index: {}]
  %s10 = sld [smem:[#allocation0]]
  $region73: #{tpu_custom_call.1} parent=0
    _
  %s12 = ssub.s32 1, %s10
  %s13 = scalar_select 0, %s12, %s10
  $region1: #{tpu_custom_call.1} parent=0
    #allocation4 [shape = 'u8[8192]{0}', space=vmem, size = 0x2000, scoped, tag = 'output window, operand 0']
    #allocation5 [shape = 's32[2]{0}', space=sflag, size = 0x8, scoped, tag = 'scoped memory for tpu_custom_call.1']
    %14 = vsyncpa [#allocation5], 0
    %s15 = scalar_lea.sflag [#allocation5], 1
    %16 = vsyncpa %s15, 0
    loop: start=0, step=1, limit=4
    $region2: #{tpu_custom_call.1} parent=1 // loop_pre_header
      _
    $region3: #{tpu_custom_call.1} parent=1 // loop_header
      %s18 = sphi 0, %s22
      %p19 = scmp.ge.s32.totalorder %s18, 4
      %s25 = sphi 0, %s37
      %s26 = sphi 0, %s33
      %s27 = sphi 0, %s25
      %s28 = sphi 0, %s26
      %s29 = sphi 0, %s27
      %s30 = sphi 0, %s28
      %s42 = sphi 0, %s44
      %s45 = sphi 0, %s42
      %s46 = sphi 0, %s45
      %s62 = sphi 0, %s46
      %s66 = sphi 0, %s66
      %s68 = sphi 0, %s66
      %s69 = sphi 0, %s68
      %s83 = sphi 0, %s69
      %s87 = sphi 0, %s87
      %s89 = sphi 0, %s87
      %s90 = sphi 0, %s89
      %s104 = sphi 0, %s90
      %s108 = sphi 0, %s108
      %s110 = sphi 0, %s108
      %s111 = sphi 0, %s110
      %s125 = sphi 0, %s111
      %s129 = sphi 0, %s129
      %s131 = sphi 0, %s129
      %s132 = sphi 0, %s131
      %s146 = sphi 0, %s132
      %s150 = sphi 0, %s150
      %s152 = sphi 0, %s150
      %s153 = sphi 0, %s152
      %s167 = sphi 0, %s153
      %s171 = sphi 0, %s171
      %s173 = sphi 0, %s171
      %s174 = sphi 0, %s173
      %s188 = sphi 0, %s174
      %s192 = sphi 0, %s192
      %s194 = sphi 0, %s192
      %s195 = sphi 0, %s194
      %s209 = sphi 0, %s195
      %s213 = sphi 0, %s213
      %s215 = sphi 0, %s213
      %s216 = sphi 0, %s215
      %s230 = sphi 0, %s216
      %s238 = sphi 0, %s240
      %s241 = sphi 0, %s238
      %s242 = sphi 0, %s241
      %s258 = sphi 0, %s242
    $region4: #{tpu_custom_call.1} parent=1 // loop_header_branch
      %21 = sbr.rel (%p19) target = $region8
    $region5: #{tpu_custom_call.1} parent=1 // loop_body
      %s23 = ssub.s32 %s18, 1
      %s24 = ssub.s32 %s18, 2
      %s31 = sadd.s32 1, %s26
      %p32 = scmp.ge.s32.totalorder %s31, 2
      %s33 = scalar_select %p32, 0, %s31
      %s34 = sadd.s32 1, %s25
      %s35 = scalar_select %p32, %s34, %s25
      %p36 = scmp.ge.s32.totalorder %s35, 1
      %s37 = scalar_select %p36, 0, %s35
      %s38 = ssub.s32 %s26, %s33
      %s39 = ssub.s32 %s25, %s37
      %s40 = sor.u32 %s38, %s39
      %p41 = scmp.eq.s32.totalorder %s40, 0
      %s43 = sadd.s32 %s42, 1
      %s44 = scalar_select %p41, %s42, %s43
      %p47 = pneg %p41
      %p48 = scmp.eq.s32.totalorder %s18, 1
      %p49 = por %p47, %p48
      %p50 = scmp.ne.s32.totalorder %s42, %s45
      %p51 = scmp.eq.s32.totalorder %s18, 0
      %p52 = por %p50, %p51
      %p53 = scmp.ne.s32.totalorder %s42, %s45
      %p54 = scmp.eq.s32.totalorder %s23, 1
      %p55 = por %p53, %p54
      %p56 = scmp.ne.s32.totalorder %s45, %s46
      %p57 = scmp.eq.s32.totalorder %s23, 0
      %p58 = por %p56, %p57
      %p59 = scmp.ne.s32.totalorder %s45, %s46
      %p60 = scmp.eq.s32.totalorder %s24, 1
      %p61 = por %p59, %p60
      %p63 = scmp.ne.s32.totalorder %s46, %s62
      %p64 = scmp.eq.s32.totalorder %s24, 0
      %p65 = por %p63, %p64
      %s67 = sadd.s32 %s66, 1
      %p70 = scmp.eq.s32.totalorder %s18, 1
      %p71 = scmp.ne.s32.totalorder %s66, %s68
      %p72 = scmp.eq.s32.totalorder %s18, 0
      %p73 = por %p71, %p72
      %p74 = scmp.ne.s32.totalorder %s66, %s68
      %p75 = scmp.eq.s32.totalorder %s23, 1
      %p76 = por %p74, %p75
      %p77 = scmp.ne.s32.totalorder %s68, %s69
      %p78 = scmp.eq.s32.totalorder %s23, 0
      %p79 = por %p77, %p78
      %p80 = scmp.ne.s32.totalorder %s68, %s69
      %p81 = scmp.eq.s32.totalorder %s24, 1
      %p82 = por %p80, %p81
      %p84 = scmp.ne.s32.totalorder %s69, %s83
      %p85 = scmp.eq.s32.totalorder %s24, 0
      %p86 = por %p84, %p85
      %s88 = sadd.s32 %s87, 1
      %p91 = scmp.eq.s32.totalorder %s18, 1
      %p92 = scmp.ne.s32.totalorder %s87, %s89
      %p93 = scmp.eq.s32.totalorder %s18, 0
      %p94 = por %p92, %p93
      %p95 = scmp.ne.s32.totalorder %s87, %s89
      %p96 = scmp.eq.s32.totalorder %s23, 1
      %p97 = por %p95, %p96
      %p98 = scmp.ne.s32.totalorder %s89, %s90
      %p99 = scmp.eq.s32.totalorder %s23, 0
      %p100 = por %p98, %p99
      %p101 = scmp.ne.s32.totalorder %s89, %s90
      %p102 = scmp.eq.s32.totalorder %s24, 1
      %p103 = por %p101, %p102
      %p105 = scmp.ne.s32.totalorder %s90, %s104
      %p106 = scmp.eq.s32.totalorder %s24, 0
      %p107 = por %p105, %p106
      %s109 = sadd.s32 %s108, 1
      %p112 = scmp.eq.s32.totalorder %s18, 1
      %p113 = scmp.ne.s32.totalorder %s108, %s110
      %p114 = scmp.eq.s32.totalorder %s18, 0
      %p115 = por %p113, %p114
      %p116 = scmp.ne.s32.totalorder %s108, %s110
      %p117 = scmp.eq.s32.totalorder %s23, 1
      %p118 = por %p116, %p117
      %p119 = scmp.ne.s32.totalorder %s110, %s111
      %p120 = scmp.eq.s32.totalorder %s23, 0
      %p121 = por %p119, %p120
      %p122 = scmp.ne.s32.totalorder %s110, %s111
      %p123 = scmp.eq.s32.totalorder %s24, 1
      %p124 = por %p122, %p123
      %p126 = scmp.ne.s32.totalorder %s111, %s125
      %p127 = scmp.eq.s32.totalorder %s24, 0
      %p128 = por %p126, %p127
      %s130 = sadd.s32 %s129, 1
      %p133 = scmp.eq.s32.totalorder %s18, 1
      %p134 = scmp.ne.s32.totalorder %s129, %s131
      %p135 = scmp.eq.s32.totalorder %s18, 0
      %p136 = por %p134, %p135
      %p137 = scmp.ne.s32.totalorder %s129, %s131
      %p138 = scmp.eq.s32.totalorder %s23, 1
      %p139 = por %p137, %p138
      %p140 = scmp.ne.s32.totalorder %s131, %s132
      %p141 = scmp.eq.s32.totalorder %s23, 0
      %p142 = por %p140, %p141
      %p143 = scmp.ne.s32.totalorder %s131, %s132
      %p144 = scmp.eq.s32.totalorder %s24, 1
      %p145 = por %p143, %p144
      %p147 = scmp.ne.s32.totalorder %s132, %s146
      %p148 = scmp.eq.s32.totalorder %s24, 0
      %p149 = por %p147, %p148
      %s151 = sadd.s32 %s150, 1
      %p154 = scmp.eq.s32.totalorder %s18, 1
      %p155 = scmp.ne.s32.totalorder %s150, %s152
      %p156 = scmp.eq.s32.totalorder %s18, 0
      %p157 = por %p155, %p156
      %p158 = scmp.ne.s32.totalorder %s150, %s152
      %p159 = scmp.eq.s32.totalorder %s23, 1
      %p160 = por %p158, %p159
      %p161 = scmp.ne.s32.totalorder %s152, %s153
      %p162 = scmp.eq.s32.totalorder %s23, 0
      %p163 = por %p161, %p162
      %p164 = scmp.ne.s32.totalorder %s152, %s153
      %p165 = scmp.eq.s32.totalorder %s24, 1
      %p166 = por %p164, %p165
      %p168 = scmp.ne.s32.totalorder %s153, %s167
      %p169 = scmp.eq.s32.totalorder %s24, 0
      %p170 = por %p168, %p169
      %s172 = sadd.s32 %s171, 1
      %p175 = scmp.eq.s32.totalorder %s18, 1
      %p176 = scmp.ne.s32.totalorder %s171, %s173
      %p177 = scmp.eq.s32.totalorder %s18, 0
      %p178 = por %p176, %p177
      %p179 = scmp.ne.s32.totalorder %s171, %s173
      %p180 = scmp.eq.s32.totalorder %s23, 1
      %p181 = por %p179, %p180
      %p182 = scmp.ne.s32.totalorder %s173, %s174
      %p183 = scmp.eq.s32.totalorder %s23, 0
      %p184 = por %p182, %p183
      %p185 = scmp.ne.s32.totalorder %s173, %s174
      %p186 = scmp.eq.s32.totalorder %s24, 1
      %p187 = por %p185, %p186
      %p189 = scmp.ne.s32.totalorder %s174, %s188
      %p190 = scmp.eq.s32.totalorder %s24, 0
      %p191 = por %p189, %p190
      %s193 = sadd.s32 %s192, 1
      %p196 = scmp.eq.s32.totalorder %s18, 1
      %p197 = scmp.ne.s32.totalorder %s192, %s194
      %p198 = scmp.eq.s32.totalorder %s18, 0
      %p199 = por %p197, %p198
      %p200 = scmp.ne.s32.totalorder %s192, %s194
      %p201 = scmp.eq.s32.totalorder %s23, 1
      %p202 = por %p200, %p201
      %p203 = scmp.ne.s32.totalorder %s194, %s195
      %p204 = scmp.eq.s32.totalorder %s23, 0
      %p205 = por %p203, %p204
      %p206 = scmp.ne.s32.totalorder %s194, %s195
      %p207 = scmp.eq.s32.totalorder %s24, 1
      %p208 = por %p206, %p207
      %p210 = scmp.ne.s32.totalorder %s195, %s209
      %p211 = scmp.eq.s32.totalorder %s24, 0
      %p212 = por %p210, %p211
      %s214 = sadd.s32 %s213, 1
      %p217 = scmp.eq.s32.totalorder %s18, 1
      %p218 = scmp.ne.s32.totalorder %s213, %s215
      %p219 = scmp.eq.s32.totalorder %s18, 0
      %p220 = por %p218, %p219
      %p221 = scmp.ne.s32.totalorder %s213, %s215
      %p222 = scmp.eq.s32.totalorder %s23, 1
      %p223 = por %p221, %p222
      %p224 = scmp.ne.s32.totalorder %s215, %s216
      %p225 = scmp.eq.s32.totalorder %s23, 0
      %p226 = por %p224, %p225
      %p227 = scmp.ne.s32.totalorder %s215, %s216
      %p228 = scmp.eq.s32.totalorder %s24, 1
      %p229 = por %p227, %p228
      %p231 = scmp.ne.s32.totalorder %s216, %s230
      %p232 = scmp.eq.s32.totalorder %s24, 0
      %p233 = por %p231, %p232
      %s234 = ssub.s32 %s26, %s33
      %s235 = ssub.s32 %s25, %s37
      %s236 = sor.u32 %s234, %s235
      %p237 = scmp.eq.s32.totalorder %s236, 0
      %s239 = sadd.s32 %s238, 1
      %s240 = scalar_select %p237, %s238, %s239
      %p243 = pneg %p237
      %p244 = scmp.eq.s32.totalorder %s18, 1
      %p245 = por %p243, %p244
      %p246 = scmp.ne.s32.totalorder %s238, %s241
      %p247 = scmp.eq.s32.totalorder %s18, 0
      %p248 = por %p246, %p247
      %p249 = scmp.ne.s32.totalorder %s238, %s241
      %p250 = scmp.eq.s32.totalorder %s23, 1
      %p251 = por %p249, %p250
      %p252 = scmp.ne.s32.totalorder %s241, %s242
      %p253 = scmp.eq.s32.totalorder %s23, 0
      %p254 = por %p252, %p253
      %p255 = scmp.ne.s32.totalorder %s241, %s242
      %p256 = scmp.eq.s32.totalorder %s24, 1
      %p257 = por %p255, %p256
      %p259 = scmp.ne.s32.totalorder %s242, %s258
      %p260 = scmp.eq.s32.totalorder %s24, 0
      %p261 = por %p259, %p260
      %p262 = scmp.le.s32.totalorder 1, %s18
      %p263 = scmp.lt.s32.totalorder %s18, 3
      %p264 = pnand %p262, %p263
      %p265 = pneg %p264
      // Predicated region
      $region9: #{tpu_custom_call.1} parent=5 // pred_check
        _
      $region10: #{tpu_custom_call.1} parent=5 // pred_check_branch
        %267 = sbr.rel (%p264) target = $region12
      $region11: #{tpu_custom_call.1} parent=5 // pred_region
        %s268 = ssub.s32 %s18, 1
        // Predicated region
        $region13: #{tpu_custom_call.1} parent=11 // pred_check
          %p269 = pneg %p79
        $region14: #{tpu_custom_call.1} parent=11 // pred_check_branch
          %271 = sbr.rel (%p269) target = $region16
        $region15: #{tpu_custom_call.1} parent=11 // pred_region
          _
        $region16: #{tpu_custom_call.1} parent=11 // pred_fallthru
          _
        // Predicated region
        $region17: #{tpu_custom_call.1} parent=11 // pred_check
          %p272 = pneg %p100
        $region18: #{tpu_custom_call.1} parent=11 // pred_check_branch
          %274 = sbr.rel (%p272) target = $region20
        $region19: #{tpu_custom_call.1} parent=11 // pred_region
          _
        $region20: #{tpu_custom_call.1} parent=11 // pred_fallthru
          _
        // Predicated region
        $region21: #{tpu_custom_call.1} parent=11 // pred_check
          %p275 = pneg %p121
        $region22: #{tpu_custom_call.1} parent=11 // pred_check_branch
          %277 = sbr.rel (%p275) target = $region24
        $region23: #{tpu_custom_call.1} parent=11 // pred_region
          _
        $region24: #{tpu_custom_call.1} parent=11 // pred_fallthru
          _
        // Predicated region
        $region25: #{tpu_custom_call.1} parent=11 // pred_check
          %p278 = pneg %p142
        $region26: #{tpu_custom_call.1} parent=11 // pred_check_branch
          %280 = sbr.rel (%p278) target = $region28
        $region27: #{tpu_custom_call.1} parent=11 // pred_region
          _
        $region28: #{tpu_custom_call.1} parent=11 // pred_fallthru
          _
        // Predicated region
        $region29: #{tpu_custom_call.1} parent=11 // pred_check
          %p281 = pneg %p163
        $region30: #{tpu_custom_call.1} parent=11 // pred_check_branch
          %283 = sbr.rel (%p281) target = $region32
        $region31: #{tpu_custom_call.1} parent=11 // pred_region
          _
        $region32: #{tpu_custom_call.1} parent=11 // pred_fallthru
          _
        // Predicated region
        $region33: #{tpu_custom_call.1} parent=11 // pred_check
          %p284 = pneg %p184
        $region34: #{tpu_custom_call.1} parent=11 // pred_check_branch
          %286 = sbr.rel (%p284) target = $region36
        $region35: #{tpu_custom_call.1} parent=11 // pred_region
          _
        $region36: #{tpu_custom_call.1} parent=11 // pred_fallthru
          _
        // Predicated region
        $region37: #{tpu_custom_call.1} parent=11 // pred_check
          %p287 = pneg %p205
        $region38: #{tpu_custom_call.1} parent=11 // pred_check_branch
          %289 = sbr.rel (%p287) target = $region40
        $region39: #{tpu_custom_call.1} parent=11 // pred_region
          _
        $region40: #{tpu_custom_call.1} parent=11 // pred_fallthru
          _
        // Predicated region
        $region41: #{tpu_custom_call.1} parent=11 // pred_check
          %p290 = pneg %p226
        $region42: #{tpu_custom_call.1} parent=11 // pred_check_branch
          %292 = sbr.rel (%p290) target = $region44
        $region43: #{tpu_custom_call.1} parent=11 // pred_region
          _
        $region44: #{tpu_custom_call.1} parent=11 // pred_fallthru
          _
      $region12: #{tpu_custom_call.1} parent=5 // pred_fallthru
        _
      %p293 = scmp.lt.s32.totalorder %s18, 2
      // Predicated region
      $region45: #{tpu_custom_call.1} parent=5 // pred_check
        %p294 = pneg %p293
      $region46: #{tpu_custom_call.1} parent=5 // pred_check_branch
        %296 = sbr.rel (%p294) target = $region48
      $region47: #{tpu_custom_call.1} parent=5 // pred_region
        // Predicated region
        $region49: #{tpu_custom_call.1} parent=47 // pred_check
          %p297 = pneg %p52
        $region50: #{tpu_custom_call.1} parent=47 // pred_check_branch
          %299 = sbr.rel (%p297) target = $region52
        $region51: #{tpu_custom_call.1} parent=47 // pred_region
          %s300 = smul.u32 2, %s25
          %p301 = scmp.lt.s32.totalorder %s26, 1
          %s302 = scalar_select %p301, %s26, 1
          %p303 = scmp.lt.s32.totalorder %s300, 1
          %s304 = scalar_select %p303, %s300, 1
          %s305 = smul.addr %s302, 2
          %s306 = sadd.s32 %s304, %s305
          %s307 = smul.addr %s306, 4
          %s308 = scalar_lea.vmem %s0, %s307
          %s309 = smul.u32 2, %s25
        $region52: #{tpu_custom_call.1} parent=47 // pred_fallthru
          _
      $region48: #{tpu_custom_call.1} parent=5 // pred_fallthru
        _
      %p310 = scmp.le.s32.totalorder 1, %s18
      %p311 = scmp.lt.s32.totalorder %s18, 3
      %p312 = pnand %p310, %p311
      %p313 = pneg %p312
      // Predicated region
      $region53: #{tpu_custom_call.1} parent=5 // pred_check
        _
      $region54: #{tpu_custom_call.1} parent=5 // pred_check_branch
        %315 = sbr.rel (%p312) target = $region56
      $region55: #{tpu_custom_call.1} parent=5 // pred_region
        %s316 = ssub.s32 %s18, 1
        %s317 = smul.u32 2, %s27
        %p318 = scmp.lt.s32.totalorder %s28, 1
        %s319 = scalar_select %p318, %s28, 1
        %p320 = scmp.lt.s32.totalorder %s317, 1
        %s321 = scalar_select %p320, %s317, 1
        %s322 = smul.addr %s319, 2
        %s323 = sadd.s32 %s321, %s322
        %s324 = smul.addr %s323, 4
        %s325 = scalar_lea.vmem %s0, %s324
        %p326 = pneg %p58
        %p327 = pneg %p55
        %p328 = pneg %p79
        %p329 = pneg %p76
        %p330 = pneg %p100
        %p331 = pneg %p97
        %p332 = pneg %p121
        %p333 = pneg %p118
        %p334 = pneg %p142
        %p335 = pneg %p139
        %p336 = pneg %p163
        %p337 = pneg %p160
        %p338 = pneg %p184
        %p339 = pneg %p181
        %p340 = pneg %p205
        %p341 = pneg %p202
        %p342 = pneg %p226
        %p343 = pneg %p223
        %p344 = pneg %p254
        %p345 = pneg %p251
        %s346 = sand.u32 %s241, 1
        %s347 = scalar_lea.sflag [#allocation5], %s346
        %s348 = sand.u32 %s241, 1
        %s349 = smul.addr %s348, 8
        %s350 = scalar_lea.vmem [#allocation4], %s349
        %s351 = smul.u32 2, %s27
        %p352 = scmp.lt.s32.totalorder %s28, 1
        %s353 = scalar_select %p352, %s28, 1
        %p354 = scmp.lt.s32.totalorder %s351, 1
        %s355 = scalar_select %p354, %s351, 1
        %s356 = smul.addr %s353, 2
        %s357 = sadd.s32 %s355, %s356
        %s358 = smul.addr %s357, 4
        %s359 = scalar_lea.vmem %s0, %s358
        %s360 = smul.u32 2, %s27
        %s361 = smul.u32 2, %s27
        %v362 = vld [vmem:[%s1] sm:$0x3]
        %v363 = vld [vmem:[%s2] sm:$0x3]
        %s364 = smul.u32 %s27, 16
        %v365 = vstv %s364
        %v366 = vadd.s32 %v363, %v365
        %vm367 = vcmp.le.s32.totalorder %v362, %v366
        %v368 = vadd.s32 %v362, 4294967295
        %vm369 = vcmp.ge.s32.totalorder %v368, 0
        %vm370 = vcmp.lt.s32.totalorder %v368, 16
        %vm371 = vmand %vm369, %vm370
        %v372 = vadd.s32 %v362, 1
        %vm373 = vcmp.ge.s32.totalorder %v372, 0
        %vm374 = vcmp.lt.s32.totalorder %v372, 16
        %vm375 = vmand %vm373, %vm374
        %p376 = scmp.eq.s32.totalorder %s28, 0
        // Predicated region
        $region57: #{tpu_custom_call.1} parent=55 // pred_check
          %p377 = pneg %p376
        $region58: #{tpu_custom_call.1} parent=55 // pred_check_branch
          %379 = sbr.rel (%p377) target = $region60
        $region59: #{tpu_custom_call.1} parent=55 // pred_region
          %v380 = vsub.s32 %v362, %v366
          %v381 = vsel %vm367, %v380, 0
          %v382 = vcvt.s32.f32 %v381
          %v383 = vld [vmem:[%s3] sm:$0xf]
          %385 = vset.pattern.permute.xlu0 0
          %386 = vperm.xlu0 %385, %v383
          %v387 = vpop.permute.xlu0 %386
          %v390 = vlaneseq
          %v391 = vshrl.u32 %v390, 7
          %v392 = vsub.s32 0, %v391
          %v393 = vrot.slane %v382, %v392
          %v394 = vlaneseq
          %v395 = vshrl.u32 %v394, 7
          %v396 = vsub.s32 1, %v395
          %v397 = vrot.slane %v382, %v396
          %v400 = vmul.f32 %v387, %v393
          %v401 = vmul.f32 %v387, %v397
          %v404 = vcombine.low %v400, %v401
          %406 = vst [vmem:[#allocation2] sm:$0xff] %v404
          %v407 = vld [vmem:[%s5] sm:$0xff]
          %v408 = vld [vmem:[%s5 + $0x8] sm:$0xff]
          %v409 = vld [vmem:[%s5 + $0x10] sm:$0xff]
          %v410 = vld [vmem:[%s5 + $0x18] sm:$0xff]
          %411 = vrot.lane.b32.xlu0 %v400, 1
          %v412 = vpop.permute.xlu0 %411
          %413 = vrot.lane.b32.xlu0 %v401, 1
          %v414 = vpop.permute.xlu0 %413
          %vm415 = vcmask 7168
          %v416 = vsel %vm415, %v412, %v414
          %v419 = vsel %vm415, 0.0, %v412
          %v420 = vsel %vm371, 1, 0
          %v421 = vlaneseq
          %v422 = vshrl.u32 %v421, 7
          %v423 = vsub.s32 0, %v422
          %v424 = vrot.slane %v420, %v423
          %v425 = vlaneseq
          %v426 = vshrl.u32 %v425, 7
          %v427 = vsub.s32 1, %v426
          %v428 = vrot.slane %v420, %v427
          %vm429 = vcmp.eq.s32.totalorder %v424, 1
          %vm430 = vcmp.eq.s32.totalorder %v428, 1
          %v431 = vsel %vm429, %v419, 0.0
          %v432 = vsel %vm430, %v416, 0.0
          %s433 = scalar_lea.vmem %s5, 32
          %v434 = vld [vmem:[%s433] sm:$0xff]
          %v435 = vld [vmem:[%s433 + $0x8] sm:$0xff]
          %v436 = vld [vmem:[%s433 + $0x10] sm:$0xff]
          %v437 = vld [vmem:[%s433 + $0x18] sm:$0xff]
          %vm438 = vcmask 31744
          %v440 = vsel %vm438, %v434, 0
          %v443 = vsel %vm438, %v435, 0
          %v446 = vsel %vm438, %v436, 0
          %v449 = vsel %vm438, %v437, 0
          %vm451 = vcmask 1043456
          %v452 = vsel %vm451, %v400, 0
          %v454 = vsel %vm451, %v401, 0
          %456 = vmatprep.subr.mxu0 %v454
          %457 = vmatpush1.msra.mxu0 %v452
          %458 = vmatprep.subr.mxu0 0.0
          %459 = vmatpush1.msra.mxu0 0.0
          %460 = vmatprep.subr.mxu0 0.0
          %461 = vmatpush1.msra.mxu0 0.0
          %462 = vmatprep.subr.mxu0 0.0
          %463 = vmatpush1.msra.mxu0 0.0
          %464 = vmatprep.subr.mxu0 0.0
          %465 = vmatpush1.msra.mxu0 0.0
          %466 = vmatprep.subr.mxu0 0.0
          %467 = vmatpush1.msra.mxu0 0.0
          %468 = vmatprep.subr.mxu0 0.0
          %469 = vmatpush1.msra.mxu0 0.0
          %470 = vmatprep.subr.mxu0 0.0
          %471 = vmatpush1.msra.mxu0 0.0
          %472 = vmatprep.subr.mxu0 0.0
          %473 = vmatpush1.msra.mxu0 0.0
          %474 = vmatprep.subr.mxu0 0.0
          %475 = vmatpush1.msra.mxu0 0.0
          %476 = vmatprep.subr.mxu0 0.0
          %477 = vmatpush1.msra.mxu0 0.0
          %478 = vmatprep.subr.mxu0 0.0
          %479 = vmatpush1.msra.mxu0 0.0
          %480 = vmatprep.subr.mxu0 0.0
          %481 = vmatpush1.msra.mxu0 0.0
          %482 = vmatprep.subr.mxu0 0.0
          %483 = vmatpush1.msra.mxu0 0.0
          %484 = vmatprep.subr.mxu0 0.0
          %485 = vmatpush1.msra.mxu0 0.0
          %486 = vmatprep.subr.mxu0 0.0
          %487 = vmatpush1.msra.mxu0 0.0
          %488 = vmatprep.subr.mxu0 0.0
          %489 = vmatpush1.msra.mxu0 0.0
          %490 = vmatprep.subr.mxu0 0.0
          %491 = vmatpush1.msra.mxu0 0.0
          %492 = vmatprep.subr.mxu0 0.0
          %493 = vmatpush1.msra.mxu0 0.0
          %494 = vmatprep.subr.mxu0 0.0
          %495 = vmatpush1.msra.mxu0 0.0
          %496 = vmatprep.subr.mxu0 0.0
          %497 = vmatpush1.msra.mxu0 0.0
          %498 = vmatprep.subr.mxu0 0.0
          %499 = vmatpush1.msra.mxu0 0.0
          %500 = vmatprep.subr.mxu0 0.0
          %501 = vmatpush1.msra.mxu0 0.0
          %502 = vmatprep.subr.mxu0 0.0
          %503 = vmatpush1.msra.mxu0 0.0
          %504 = vmatprep.subr.mxu0 0.0
          %505 = vmatpush1.msra.mxu0 0.0
          %506 = vmatprep.subr.mxu0 0.0
          %507 = vmatpush1.msra.mxu0 0.0
          %508 = vmatprep.subr.mxu0 0.0
          %509 = vmatpush1.msra.mxu0 0.0
          %510 = vmatprep.subr.mxu0 0.0
          %511 = vmatpush1.msra.mxu0 0.0
          %512 = vmatprep.subr.mxu0 0.0
          %513 = vmatpush1.msra.mxu0 0.0
          %514 = vmatprep.subr.mxu0 0.0
          %515 = vmatpush1.msra.mxu0 0.0
          %516 = vmatprep.subr.mxu0 0.0
          %517 = vmatpush1.msra.mxu0 0.0
          %518 = vmatprep.subr.mxu0 0.0
          %519 = vmatpush1.msra.mxu0 0.0
          %520 = vmatprep.mubr.f32.mxu0 0.0
          %521 = vmatmul.mubr.f32.gmra.mrb[0].mxu0 %v440
          %v522 = vpop.f32.mrb[0].mxu0
          %v523 = vadd.f32 0.0, %v522
          %v524 = vpop.f32.mrb[0].mxu0
          %v525 = vadd.f32 0.0, %v524
          %526 = vmatprep.mubr.f32.mxu0 0.0
          %527 = vmatmul.mubr.f32.gmra.mrb[0].mxu0 %v443
          %v528 = vpop.f32.mrb[0].mxu0
          %v529 = vadd.f32 0.0, %v528
          %v530 = vpop.f32.mrb[0].mxu0
          %v531 = vadd.f32 0.0, %v530
          %532 = vmatprep.mubr.f32.mxu0 0.0
          %533 = vmatmul.mubr.f32.gmra.mrb[0].mxu0 %v446
          %v534 = vpop.f32.mrb[0].mxu0
          %v535 = vadd.f32 0.0, %v534
          %v536 = vpop.f32.mrb[0].mxu0
          %v537 = vadd.f32 0.0, %v536
          %538 = vmatprep.mubr.f32.mxu0 0.0
          %539 = vmatmul.mubr.f32.gmra.mrb[0].mxu0 %v449
          %v540 = vpop.f32.mrb[0].mxu0
          %v541 = vadd.f32 0.0, %v540
          %v542 = vpop.f32.mrb[0].mxu0
          %v543 = vadd.f32 0.0, %v542
          %544 = vdwg.mxu0
          %v546 = vsel %vm438, %v407, 0
          %v549 = vsel %vm438, %v408, 0
          %v552 = vsel %vm438, %v409, 0
          %v555 = vsel %vm438, %v410, 0
          %v558 = vsel %vm451, %v431, 0
          %v561 = vsel %vm451, %v432, 0
          %563 = vmatprep.subr.mxu0 %v561
          %564 = vmatpush1.msra.mxu0 %v558
          %565 = vmatprep.subr.mxu0 0.0
          %566 = vmatpush1.msra.mxu0 0.0
          %567 = vmatprep.subr.mxu0 0.0
          %568 = vmatpush1.msra.mxu0 0.0
          %569 = vmatprep.subr.mxu0 0.0
          %570 = vmatpush1.msra.mxu0 0.0
          %571 = vmatprep.subr.mxu0 0.0
          %572 = vmatpush1.msra.mxu0 0.0
          %573 = vmatprep.subr.mxu0 0.0
          %574 = vmatpush1.msra.mxu0 0.0
          %575 = vmatprep.subr.mxu0 0.0
          %576 = vmatpush1.msra.mxu0 0.0
          %577 = vmatprep.subr.mxu0 0.0
          %578 = vmatpush1.msra.mxu0 0.0
          %579 = vmatprep.subr.mxu0 0.0
          %580 = vmatpush1.msra.mxu0 0.0
          %581 = vmatprep.subr.mxu0 0.0
          %582 = vmatpush1.msra.mxu0 0.0
          %583 = vmatprep.subr.mxu0 0.0
          %584 = vmatpush1.msra.mxu0 0.0
          %585 = vmatprep.subr.mxu0 0.0
          %586 = vmatpush1.msra.mxu0 0.0
          %587 = vmatprep.subr.mxu0 0.0
          %588 = vmatpush1.msra.mxu0 0.0
          %589 = vmatprep.subr.mxu0 0.0
          %590 = vmatpush1.msra.mxu0 0.0
          %591 = vmatprep.subr.mxu0 0.0
          %592 = vmatpush1.msra.mxu0 0.0
          %593 = vmatprep.subr.mxu0 0.0
          %594 = vmatpush1.msra.mxu0 0.0
          %595 = vmatprep.subr.mxu0 0.0
          %596 = vmatpush1.msra.mxu0 0.0
          %597 = vmatprep.subr.mxu0 0.0
          %598 = vmatpush1.msra.mxu0 0.0
          %599 = vmatprep.subr.mxu0 0.0
          %600 = vmatpush1.msra.mxu0 0.0
          %601 = vmatprep.subr.mxu0 0.0
          %602 = vmatpush1.msra.mxu0 0.0
          %603 = vmatprep.subr.mxu0 0.0
          %604 = vmatpush1.msra.mxu0 0.0
          %605 = vmatprep.subr.mxu0 0.0
          %606 = vmatpush1.msra.mxu0 0.0
          %607 = vmatprep.subr.mxu0 0.0
          %608 = vmatpush1.msra.mxu0 0.0
          %609 = vmatprep.subr.mxu0 0.0
          %610 = vmatpush1.msra.mxu0 0.0
          %611 = vmatprep.subr.mxu0 0.0
          %612 = vmatpush1.msra.mxu0 0.0
          %613 = vmatprep.subr.mxu0 0.0
          %614 = vmatpush1.msra.mxu0 0.0
          %615 = vmatprep.subr.mxu0 0.0
          %616 = vmatpush1.msra.mxu0 0.0
          %617 = vmatprep.subr.mxu0 0.0
          %618 = vmatpush1.msra.mxu0 0.0
          %619 = vmatprep.subr.mxu0 0.0
          %620 = vmatpush1.msra.mxu0 0.0
          %621 = vmatprep.subr.mxu0 0.0
          %622 = vmatpush1.msra.mxu0 0.0
          %623 = vmatprep.subr.mxu0 0.0
          %624 = vmatpush1.msra.mxu0 0.0
          %625 = vmatprep.subr.mxu0 0.0
          %626 = vmatpush1.msra.mxu0 0.0
          %627 = vmatprep.mubr.f32.mxu0 0.0
          %628 = vmatmul.mubr.f32.gmra.mrb[0].mxu0 %v546
          %v629 = vpop.f32.mrb[0].mxu0
          %v630 = vadd.f32 %v523, %v629
          %v631 = vpop.f32.mrb[0].mxu0
          %v632 = vadd.f32 %v525, %v631
          %633 = vmatprep.mubr.f32.mxu0 0.0
          %634 = vmatmul.mubr.f32.gmra.mrb[0].mxu0 %v549
          %v635 = vpop.f32.mrb[0].mxu0
          %v636 = vadd.f32 %v529, %v635
          %v637 = vpop.f32.mrb[0].mxu0
          %v638 = vadd.f32 %v531, %v637
          %639 = vmatprep.mubr.f32.mxu0 0.0
          %640 = vmatmul.mubr.f32.gmra.mrb[0].mxu0 %v552
          %v641 = vpop.f32.mrb[0].mxu0
          %v642 = vadd.f32 %v535, %v641
          %v643 = vpop.f32.mrb[0].mxu0
          %v644 = vadd.f32 %v537, %v643
          %645 = vmatprep.mubr.f32.mxu0 0.0
          %646 = vmatmul.mubr.f32.gmra.mrb[0].mxu0 %v555
          %v647 = vpop.f32.mrb[0].mxu0
          %v648 = vadd.f32 %v541, %v647
          %v649 = vpop.f32.mrb[0].mxu0
          %v650 = vadd.f32 %v543, %v649
          %651 = vdwg.mxu0
          %s652 = scalar_lea.vmem %s5, 64
          %v653 = vld [vmem:[%s652] sm:$0xff]
          %v654 = vld [vmem:[%s652 + $0x8] sm:$0xff]
          %v655 = vld [vmem:[%s652 + $0x10] sm:$0xff]
          %v656 = vld [vmem:[%s652 + $0x18] sm:$0xff]
          %657 = vrot.lane.b32.xlu0 %v400, 127
          %v658 = vpop.permute.xlu0 %657
          %659 = vrot.lane.b32.xlu0 %v401, 127
          %v660 = vpop.permute.xlu0 %659
          %vm661 = vcmask 1039360
          %v662 = vsel %vm661, %v658, %v660
          %v665 = vsel %vm661, %v660, 0.0
          %v666 = vsel %vm375, 1, 0
          %v667 = vlaneseq
          %v668 = vshrl.u32 %v667, 7
          %v669 = vsub.s32 0, %v668
          %v670 = vrot.slane %v666, %v669
          %v671 = vlaneseq
          %v672 = vshrl.u32 %v671, 7
          %v673 = vsub.s32 1, %v672
          %v674 = vrot.slane %v666, %v673
          %vm675 = vcmp.eq.s32.totalorder %v670, 1
          %vm676 = vcmp.eq.s32.totalorder %v674, 1
          %v677 = vsel %vm675, %v662, 0.0
          %v678 = vsel %vm676, %v665, 0.0
          %v680 = vsel %vm438, %v653, 0
          %v683 = vsel %vm438, %v654, 0
          %v686 = vsel %vm438, %v655, 0
          %v689 = vsel %vm438, %v656, 0
          %v692 = vsel %vm451, %v677, 0
          %v695 = vsel %vm451, %v678, 0
          %697 = vmatprep.subr.mxu0 %v695
          %698 = vmatpush1.msra.mxu0 %v692
          %699 = vmatprep.subr.mxu0 0.0
          %700 = vmatpush1.msra.mxu0 0.0
          %701 = vmatprep.subr.mxu0 0.0
          %702 = vmatpush1.msra.mxu0 0.0
          %703 = vmatprep.subr.mxu0 0.0
          %704 = vmatpush1.msra.mxu0 0.0
          %705 = vmatprep.subr.mxu0 0.0
          %706 = vmatpush1.msra.mxu0 0.0
          %707 = vmatprep.subr.mxu0 0.0
          %708 = vmatpush1.msra.mxu0 0.0
          %709 = vmatprep.subr.mxu0 0.0
          %710 = vmatpush1.msra.mxu0 0.0
          %711 = vmatprep.subr.mxu0 0.0
          %712 = vmatpush1.msra.mxu0 0.0
          %713 = vmatprep.subr.mxu0 0.0
          %714 = vmatpush1.msra.mxu0 0.0
          %715 = vmatprep.subr.mxu0 0.0
          %716 = vmatpush1.msra.mxu0 0.0
          %717 = vmatprep.subr.mxu0 0.0
          %718 = vmatpush1.msra.mxu0 0.0
          %719 = vmatprep.subr.mxu0 0.0
          %720 = vmatpush1.msra.mxu0 0.0
          %721 = vmatprep.subr.mxu0 0.0
          %722 = vmatpush1.msra.mxu0 0.0
          %723 = vmatprep.subr.mxu0 0.0
          %724 = vmatpush1.msra.mxu0 0.0
          %725 = vmatprep.subr.mxu0 0.0
          %726 = vmatpush1.msra.mxu0 0.0
          %727 = vmatprep.subr.mxu0 0.0
          %728 = vmatpush1.msra.mxu0 0.0
          %729 = vmatprep.subr.mxu0 0.0
          %730 = vmatpush1.msra.mxu0 0.0
          %731 = vmatprep.subr.mxu0 0.0
          %732 = vmatpush1.msra.mxu0 0.0
          %733 = vmatprep.subr.mxu0 0.0
          %734 = vmatpush1.msra.mxu0 0.0
          %735 = vmatprep.subr.mxu0 0.0
          %736 = vmatpush1.msra.mxu0 0.0
          %737 = vmatprep.subr.mxu0 0.0
          %738 = vmatpush1.msra.mxu0 0.0
          %739 = vmatprep.subr.mxu0 0.0
          %740 = vmatpush1.msra.mxu0 0.0
          %741 = vmatprep.subr.mxu0 0.0
          %742 = vmatpush1.msra.mxu0 0.0
          %743 = vmatprep.subr.mxu0 0.0
          %744 = vmatpush1.msra.mxu0 0.0
          %745 = vmatprep.subr.mxu0 0.0
          %746 = vmatpush1.msra.mxu0 0.0
          %747 = vmatprep.subr.mxu0 0.0
          %748 = vmatpush1.msra.mxu0 0.0
          %749 = vmatprep.subr.mxu0 0.0
          %750 = vmatpush1.msra.mxu0 0.0
          %751 = vmatprep.subr.mxu0 0.0
          %752 = vmatpush1.msra.mxu0 0.0
          %753 = vmatprep.subr.mxu0 0.0
          %754 = vmatpush1.msra.mxu0 0.0
          %755 = vmatprep.subr.mxu0 0.0
          %756 = vmatpush1.msra.mxu0 0.0
          %757 = vmatprep.subr.mxu0 0.0
          %758 = vmatpush1.msra.mxu0 0.0
          %759 = vmatprep.subr.mxu0 0.0
          %760 = vmatpush1.msra.mxu0 0.0
          %761 = vmatprep.mubr.f32.mxu0 0.0
          %762 = vmatmul.mubr.f32.gmra.mrb[0].mxu0 %v680
          %v763 = vpop.f32.mrb[0].mxu0
          %v764 = vadd.f32 0.0, %v763
          %v765 = vpop.f32.mrb[0].mxu0
          %v766 = vadd.f32 0.0, %v765
          %767 = vmatprep.mubr.f32.mxu0 0.0
          %768 = vmatmul.mubr.f32.gmra.mrb[0].mxu0 %v683
          %v769 = vpop.f32.mrb[0].mxu0
          %v770 = vadd.f32 0.0, %v769
          %v771 = vpop.f32.mrb[0].mxu0
          %v772 = vadd.f32 0.0, %v771
          %773 = vmatprep.mubr.f32.mxu0 0.0
          %774 = vmatmul.mubr.f32.gmra.mrb[0].mxu0 %v686
          %v775 = vpop.f32.mrb[0].mxu0
          %v776 = vadd.f32 0.0, %v775
          %v777 = vpop.f32.mrb[0].mxu0
          %v778 = vadd.f32 0.0, %v777
          %779 = vmatprep.mubr.f32.mxu0 0.0
          %780 = vmatmul.mubr.f32.gmra.mrb[0].mxu0 %v689
          %v781 = vpop.f32.mrb[0].mxu0
          %v782 = vadd.f32 0.0, %v781
          %v783 = vpop.f32.mrb[0].mxu0
          %v784 = vadd.f32 0.0, %v783
          %785 = vdwg.mxu0
          %v786 = vadd.f32 %v630, %v764
          %v787 = vadd.f32 %v632, %v766
          %v788 = vadd.f32 %v636, %v770
          %v789 = vadd.f32 %v638, %v772
          %v790 = vadd.f32 %v642, %v776
          %v791 = vadd.f32 %v644, %v778
          %v792 = vadd.f32 %v648, %v782
          %v793 = vadd.f32 %v650, %v784
          %v794 = vld [vmem:[%s6] sm:$0xff]
          %v795 = vld [vmem:[%s6 + $0x8] sm:$0xff]
          %v796 = vld [vmem:[%s6 + $0x10] sm:$0xff]
          %v797 = vld [vmem:[%s6 + $0x18] sm:$0xff]
          %799 = vset.pattern.permute.xlu0 0
          %800 = vperm.xlu0 %799, %v794
          %v801 = vpop.permute.xlu0 %800
          %804 = vset.pattern.permute.xlu0 0
          %805 = vperm.xlu0 %804, %v795
          %v806 = vpop.permute.xlu0 %805
          %809 = vset.pattern.permute.xlu0 0
          %810 = vperm.xlu0 %809, %v796
          %v811 = vpop.permute.xlu0 %810
          %814 = vset.pattern.permute.xlu0 0
          %815 = vperm.xlu0 %814, %v797
          %v816 = vpop.permute.xlu0 %815
          %v818 = vadd.f32 %v786, %v801
          %v819 = vadd.f32 %v787, %v801
          %v820 = vadd.f32 %v788, %v806
          %v821 = vadd.f32 %v789, %v806
          %v822 = vadd.f32 %v790, %v811
          %v823 = vadd.f32 %v791, %v811
          %v824 = vadd.f32 %v792, %v816
          %v825 = vadd.f32 %v793, %v816
          %826 = vst [vmem:[#allocation3] sm:$0xff] %v818
          %827 = vst [vmem:[#allocation3 + $0x8] sm:$0xff] %v819
          %828 = vst [vmem:[#allocation3 + $0x10] sm:$0xff] %v820
          %829 = vst [vmem:[#allocation3 + $0x18] sm:$0xff] %v821
          %830 = vst [vmem:[#allocation3 + $0x20] sm:$0xff] %v822
          %831 = vst [vmem:[#allocation3 + $0x28] sm:$0xff] %v823
          %832 = vst [vmem:[#allocation3 + $0x30] sm:$0xff] %v824
          %833 = vst [vmem:[#allocation3 + $0x38] sm:$0xff] %v825
        $region60: #{tpu_custom_call.1} parent=55 // pred_fallthru
          _
        %v834 = vld [vmem:[%s359] sm:$0xff]
        %v835 = vsel %vm367, 1, 0
        %v836 = vlaneseq
        %v837 = vshrl.u32 %v836, 7
        %v838 = vsub.s32 0, %v837
        %v839 = vrot.slane %v835, %v838
        %v840 = vlaneseq
        %v841 = vshrl.u32 %v840, 7
        %v842 = vsub.s32 1, %v841
        %v843 = vrot.slane %v835, %v842
        %vm844 = vcmp.eq.s32.totalorder %v839, 1
        %vm845 = vcmp.eq.s32.totalorder %v843, 1
        %v847 = vcombine.high %v834, %v834
        %v849 = vsel %vm844, %v834, 0.0
        %v850 = vsel %vm845, %v847, 0.0
        %v851 = vld [vmem:[#allocation3] sm:$0xff]
        %v852 = vld [vmem:[#allocation3 + $0x8] sm:$0xff]
        %v853 = vld [vmem:[#allocation3 + $0x10] sm:$0xff]
        %v854 = vld [vmem:[#allocation3 + $0x18] sm:$0xff]
        %v855 = vld [vmem:[#allocation3 + $0x20] sm:$0xff]
        %v856 = vld [vmem:[#allocation3 + $0x28] sm:$0xff]
        %v857 = vld [vmem:[#allocation3 + $0x30] sm:$0xff]
        %v858 = vld [vmem:[#allocation3 + $0x38] sm:$0xff]
        %v859 = vld [vmem:[%s4] sm:$0xff]
        %v860 = vld [vmem:[%s4 + $0x8] sm:$0xff]
        %v861 = vld [vmem:[%s4 + $0x10] sm:$0xff]
        %v862 = vld [vmem:[%s4 + $0x18] sm:$0xff]
        %865 = vrot.lane.b32.xlu0 %v849, 1
        %v866 = vpop.permute.xlu0 %865
        %867 = vrot.lane.b32.xlu0 %v850, 1
        %v868 = vpop.permute.xlu0 %867
        %vm869 = vcmask 7168
        %v870 = vsel %vm869, %v866, %v868
        %v873 = vsel %vm869, 0.0, %v866
        %v874 = vsel %vm371, 1, 0
        %v875 = vlaneseq
        %v876 = vshrl.u32 %v875, 7
        %v877 = vsub.s32 0, %v876
        %v878 = vrot.slane %v874, %v877
        %v879 = vlaneseq
        %v880 = vshrl.u32 %v879, 7
        %v881 = vsub.s32 1, %v880
        %v882 = vrot.slane %v874, %v881
        %vm883 = vcmp.eq.s32.totalorder %v878, 1
        %vm884 = vcmp.eq.s32.totalorder %v882, 1
        %v885 = vsel %vm883, %v873, 0.0
        %v886 = vsel %vm884, %v870, 0.0
        %vm887 = vcmask 31744
        %v889 = vsel %vm887, %v859, 0
        %v892 = vsel %vm887, %v860, 0
        %v895 = vsel %vm887, %v861, 0
        %v898 = vsel %vm887, %v862, 0
        %vm900 = vcmask 1043456
        %v902 = vsel %vm900, %v885, 0
        %v905 = vsel %vm900, %v886, 0
        %907 = vmatprep.subr.mxu0 %v905
        %908 = vmatpush1.msra.mxu0 %v902
        %909 = vmatprep.subr.mxu0 0.0
        %910 = vmatpush1.msra.mxu0 0.0
        %911 = vmatprep.subr.mxu0 0.0
        %912 = vmatpush1.msra.mxu0 0.0
        %913 = vmatprep.subr.mxu0 0.0
        %914 = vmatpush1.msra.mxu0 0.0
        %915 = vmatprep.subr.mxu0 0.0
        %916 = vmatpush1.msra.mxu0 0.0
        %917 = vmatprep.subr.mxu0 0.0
        %918 = vmatpush1.msra.mxu0 0.0
        %919 = vmatprep.subr.mxu0 0.0
        %920 = vmatpush1.msra.mxu0 0.0
        %921 = vmatprep.subr.mxu0 0.0
        %922 = vmatpush1.msra.mxu0 0.0
        %923 = vmatprep.subr.mxu0 0.0
        %924 = vmatpush1.msra.mxu0 0.0
        %925 = vmatprep.subr.mxu0 0.0
        %926 = vmatpush1.msra.mxu0 0.0
        %927 = vmatprep.subr.mxu0 0.0
        %928 = vmatpush1.msra.mxu0 0.0
        %929 = vmatprep.subr.mxu0 0.0
        %930 = vmatpush1.msra.mxu0 0.0
        %931 = vmatprep.subr.mxu0 0.0
        %932 = vmatpush1.msra.mxu0 0.0
        %933 = vmatprep.subr.mxu0 0.0
        %934 = vmatpush1.msra.mxu0 0.0
        %935 = vmatprep.subr.mxu0 0.0
        %936 = vmatpush1.msra.mxu0 0.0
        %937 = vmatprep.subr.mxu0 0.0
        %938 = vmatpush1.msra.mxu0 0.0
        %939 = vmatprep.subr.mxu0 0.0
        %940 = vmatpush1.msra.mxu0 0.0
        %941 = vmatprep.subr.mxu0 0.0
        %942 = vmatpush1.msra.mxu0 0.0
        %943 = vmatprep.subr.mxu0 0.0
        %944 = vmatpush1.msra.mxu0 0.0
        %945 = vmatprep.subr.mxu0 0.0
        %946 = vmatpush1.msra.mxu0 0.0
        %947 = vmatprep.subr.mxu0 0.0
        %948 = vmatpush1.msra.mxu0 0.0
        %949 = vmatprep.subr.mxu0 0.0
        %950 = vmatpush1.msra.mxu0 0.0
        %951 = vmatprep.subr.mxu0 0.0
        %952 = vmatpush1.msra.mxu0 0.0
        %953 = vmatprep.subr.mxu0 0.0
        %954 = vmatpush1.msra.mxu0 0.0
        %955 = vmatprep.subr.mxu0 0.0
        %956 = vmatpush1.msra.mxu0 0.0
        %957 = vmatprep.subr.mxu0 0.0
        %958 = vmatpush1.msra.mxu0 0.0
        %959 = vmatprep.subr.mxu0 0.0
        %960 = vmatpush1.msra.mxu0 0.0
        %961 = vmatprep.subr.mxu0 0.0
        %962 = vmatpush1.msra.mxu0 0.0
        %963 = vmatprep.subr.mxu0 0.0
        %964 = vmatpush1.msra.mxu0 0.0
        %965 = vmatprep.subr.mxu0 0.0
        %966 = vmatpush1.msra.mxu0 0.0
        %967 = vmatprep.subr.mxu0 0.0
        %968 = vmatpush1.msra.mxu0 0.0
        %969 = vmatprep.subr.mxu0 0.0
        %970 = vmatpush1.msra.mxu0 0.0
        %971 = vmatprep.mubr.f32.mxu0 0.0
        %972 = vmatmul.mubr.f32.gmra.mrb[0].mxu0 %v889
        %v973 = vpop.f32.mrb[0].mxu0
        %v974 = vadd.f32 0.0, %v973
        %v975 = vpop.f32.mrb[0].mxu0
        %v976 = vadd.f32 0.0, %v975
        %977 = vmatprep.mubr.f32.mxu0 0.0
        %978 = vmatmul.mubr.f32.gmra.mrb[0].mxu0 %v892
        %v979 = vpop.f32.mrb[0].mxu0
        %v980 = vadd.f32 0.0, %v979
        %v981 = vpop.f32.mrb[0].mxu0
        %v982 = vadd.f32 0.0, %v981
        %983 = vmatprep.mubr.f32.mxu0 0.0
        %984 = vmatmul.mubr.f32.gmra.mrb[0].mxu0 %v895
        %v985 = vpop.f32.mrb[0].mxu0
        %v986 = vadd.f32 0.0, %v985
        %v987 = vpop.f32.mrb[0].mxu0
        %v988 = vadd.f32 0.0, %v987
        %989 = vmatprep.mubr.f32.mxu0 0.0
        %990 = vmatmul.mubr.f32.gmra.mrb[0].mxu0 %v898
        %v991 = vpop.f32.mrb[0].mxu0
        %v992 = vadd.f32 0.0, %v991
        %v993 = vpop.f32.mrb[0].mxu0
        %v994 = vadd.f32 0.0, %v993
        %995 = vdwg.mxu0
        %v996 = vadd.f32 %v851, %v974
        %v997 = vadd.f32 %v852, %v976
        %v998 = vadd.f32 %v853, %v980
        %v999 = vadd.f32 %v854, %v982
        %v1000 = vadd.f32 %v855, %v986
        %v1001 = vadd.f32 %v856, %v988
        %v1002 = vadd.f32 %v857, %v992
        %v1003 = vadd.f32 %v858, %v994
        %s1004 = scalar_lea.vmem %s4, 32
        %v1005 = vld [vmem:[%s1004] sm:$0xff]
        %v1006 = vld [vmem:[%s1004 + $0x8] sm:$0xff]
        %v1007 = vld [vmem:[%s1004 + $0x10] sm:$0xff]
        %v1008 = vld [vmem:[%s1004 + $0x18] sm:$0xff]
        %v1010 = vsel %vm887, %v1005, 0
        %v1013 = vsel %vm887, %v1006, 0
        %v1016 = vsel %vm887, %v1007, 0
        %v1019 = vsel %vm887, %v1008, 0
        %v1021 = vsel %vm900, %v849, 0
        %v1023 = vsel %vm900, %v850, 0
        %1025 = vmatprep.subr.mxu0 %v1023
        %1026 = vmatpush1.msra.mxu0 %v1021
        %1027 = vmatprep.subr.mxu0 0.0
        %1028 = vmatpush1.msra.mxu0 0.0
        %1029 = vmatprep.subr.mxu0 0.0
        %1030 = vmatpush1.msra.mxu0 0.0
        %1031 = vmatprep.subr.mxu0 0.0
        %1032 = vmatpush1.msra.mxu0 0.0
        %1033 = vmatprep.subr.mxu0 0.0
        %1034 = vmatpush1.msra.mxu0 0.0
        %1035 = vmatprep.subr.mxu0 0.0
        %1036 = vmatpush1.msra.mxu0 0.0
        %1037 = vmatprep.subr.mxu0 0.0
        %1038 = vmatpush1.msra.mxu0 0.0
        %1039 = vmatprep.subr.mxu0 0.0
        %1040 = vmatpush1.msra.mxu0 0.0
        %1041 = vmatprep.subr.mxu0 0.0
        %1042 = vmatpush1.msra.mxu0 0.0
        %1043 = vmatprep.subr.mxu0 0.0
        %1044 = vmatpush1.msra.mxu0 0.0
        %1045 = vmatprep.subr.mxu0 0.0
        %1046 = vmatpush1.msra.mxu0 0.0
        %1047 = vmatprep.subr.mxu0 0.0
        %1048 = vmatpush1.msra.mxu0 0.0
        %1049 = vmatprep.subr.mxu0 0.0
        %1050 = vmatpush1.msra.mxu0 0.0
        %1051 = vmatprep.subr.mxu0 0.0
        %1052 = vmatpush1.msra.mxu0 0.0
        %1053 = vmatprep.subr.mxu0 0.0
        %1054 = vmatpush1.msra.mxu0 0.0
        %1055 = vmatprep.subr.mxu0 0.0
        %1056 = vmatpush1.msra.mxu0 0.0
        %1057 = vmatprep.subr.mxu0 0.0
        %1058 = vmatpush1.msra.mxu0 0.0
        %1059 = vmatprep.subr.mxu0 0.0
        %1060 = vmatpush1.msra.mxu0 0.0
        %1061 = vmatprep.subr.mxu0 0.0
        %1062 = vmatpush1.msra.mxu0 0.0
        %1063 = vmatprep.subr.mxu0 0.0
        %1064 = vmatpush1.msra.mxu0 0.0
        %1065 = vmatprep.subr.mxu0 0.0
        %1066 = vmatpush1.msra.mxu0 0.0
        %1067 = vmatprep.subr.mxu0 0.0
        %1068 = vmatpush1.msra.mxu0 0.0
        %1069 = vmatprep.subr.mxu0 0.0
        %1070 = vmatpush1.msra.mxu0 0.0
        %1071 = vmatprep.subr.mxu0 0.0
        %1072 = vmatpush1.msra.mxu0 0.0
        %1073 = vmatprep.subr.mxu0 0.0
        %1074 = vmatpush1.msra.mxu0 0.0
        %1075 = vmatprep.subr.mxu0 0.0
        %1076 = vmatpush1.msra.mxu0 0.0
        %1077 = vmatprep.subr.mxu0 0.0
        %1078 = vmatpush1.msra.mxu0 0.0
        %1079 = vmatprep.subr.mxu0 0.0
        %1080 = vmatpush1.msra.mxu0 0.0
        %1081 = vmatprep.subr.mxu0 0.0
        %1082 = vmatpush1.msra.mxu0 0.0
        %1083 = vmatprep.subr.mxu0 0.0
        %1084 = vmatpush1.msra.mxu0 0.0
        %1085 = vmatprep.subr.mxu0 0.0
        %1086 = vmatpush1.msra.mxu0 0.0
        %1087 = vmatprep.subr.mxu0 0.0
        %1088 = vmatpush1.msra.mxu0 0.0
        %1089 = vmatprep.mubr.f32.mxu0 0.0
        %1090 = vmatmul.mubr.f32.gmra.mrb[0].mxu0 %v1010
        %v1091 = vpop.f32.mrb[0].mxu0
        %v1092 = vadd.f32 0.0, %v1091
        %v1093 = vpop.f32.mrb[0].mxu0
        %v1094 = vadd.f32 0.0, %v1093
        %1095 = vmatprep.mubr.f32.mxu0 0.0
        %1096 = vmatmul.mubr.f32.gmra.mrb[0].mxu0 %v1013
        %v1097 = vpop.f32.mrb[0].mxu0
        %v1098 = vadd.f32 0.0, %v1097
        %v1099 = vpop.f32.mrb[0].mxu0
        %v1100 = vadd.f32 0.0, %v1099
        %1101 = vmatprep.mubr.f32.mxu0 0.0
        %1102 = vmatmul.mubr.f32.gmra.mrb[0].mxu0 %v1016
        %v1103 = vpop.f32.mrb[0].mxu0
        %v1104 = vadd.f32 0.0, %v1103
        %v1105 = vpop.f32.mrb[0].mxu0
        %v1106 = vadd.f32 0.0, %v1105
        %1107 = vmatprep.mubr.f32.mxu0 0.0
        %1108 = vmatmul.mubr.f32.gmra.mrb[0].mxu0 %v1019
        %v1109 = vpop.f32.mrb[0].mxu0
        %v1110 = vadd.f32 0.0, %v1109
        %v1111 = vpop.f32.mrb[0].mxu0
        %v1112 = vadd.f32 0.0, %v1111
        %1113 = vdwg.mxu0
        %v1114 = vadd.f32 %v996, %v1092
        %v1115 = vadd.f32 %v997, %v1094
        %v1116 = vadd.f32 %v998, %v1098
        %v1117 = vadd.f32 %v999, %v1100
        %v1118 = vadd.f32 %v1000, %v1104
        %v1119 = vadd.f32 %v1001, %v1106
        %v1120 = vadd.f32 %v1002, %v1110
        %v1121 = vadd.f32 %v1003, %v1112
        %s1122 = scalar_lea.vmem %s4, 64
        %v1123 = vld [vmem:[%s1122] sm:$0xff]
        %v1124 = vld [vmem:[%s1122 + $0x8] sm:$0xff]
        %v1125 = vld [vmem:[%s1122 + $0x10] sm:$0xff]
        %v1126 = vld [vmem:[%s1122 + $0x18] sm:$0xff]
        %1127 = vrot.lane.b32.xlu0 %v849, 127
        %v1128 = vpop.permute.xlu0 %1127
        %1129 = vrot.lane.b32.xlu0 %v850, 127
        %v1130 = vpop.permute.xlu0 %1129
        %vm1131 = vcmask 1039360
        %v1132 = vsel %vm1131, %v1128, %v1130
        %v1135 = vsel %vm1131, %v1130, 0.0
        %v1136 = vsel %vm375, 1, 0
        %v1137 = vlaneseq
        %v1138 = vshrl.u32 %v1137, 7
        %v1139 = vsub.s32 0, %v1138
        %v1140 = vrot.slane %v1136, %v1139
        %v1141 = vlaneseq
        %v1142 = vshrl.u32 %v1141, 7
        %v1143 = vsub.s32 1, %v1142
        %v1144 = vrot.slane %v1136, %v1143
        %vm1145 = vcmp.eq.s32.totalorder %v1140, 1
        %vm1146 = vcmp.eq.s32.totalorder %v1144, 1
        %v1147 = vsel %vm1145, %v1132, 0.0
        %v1148 = vsel %vm1146, %v1135, 0.0
        %v1150 = vsel %vm887, %v1123, 0
        %v1153 = vsel %vm887, %v1124, 0
        %v1156 = vsel %vm887, %v1125, 0
        %v1159 = vsel %vm887, %v1126, 0
        %v1162 = vsel %vm900, %v1147, 0
        %v1165 = vsel %vm900, %v1148, 0
        %1167 = vmatprep.subr.mxu0 %v1165
        %1168 = vmatpush1.msra.mxu0 %v1162
        %1169 = vmatprep.subr.mxu0 0.0
        %1170 = vmatpush1.msra.mxu0 0.0
        %1171 = vmatprep.subr.mxu0 0.0
        %1172 = vmatpush1.msra.mxu0 0.0
        %1173 = vmatprep.subr.mxu0 0.0
        %1174 = vmatpush1.msra.mxu0 0.0
        %1175 = vmatprep.subr.mxu0 0.0
        %1176 = vmatpush1.msra.mxu0 0.0
        %1177 = vmatprep.subr.mxu0 0.0
        %1178 = vmatpush1.msra.mxu0 0.0
        %1179 = vmatprep.subr.mxu0 0.0
        %1180 = vmatpush1.msra.mxu0 0.0
        %1181 = vmatprep.subr.mxu0 0.0
        %1182 = vmatpush1.msra.mxu0 0.0
        %1183 = vmatprep.subr.mxu0 0.0
        %1184 = vmatpush1.msra.mxu0 0.0
        %1185 = vmatprep.subr.mxu0 0.0
        %1186 = vmatpush1.msra.mxu0 0.0
        %1187 = vmatprep.subr.mxu0 0.0
        %1188 = vmatpush1.msra.mxu0 0.0
        %1189 = vmatprep.subr.mxu0 0.0
        %1190 = vmatpush1.msra.mxu0 0.0
        %1191 = vmatprep.subr.mxu0 0.0
        %1192 = vmatpush1.msra.mxu0 0.0
        %1193 = vmatprep.subr.mxu0 0.0
        %1194 = vmatpush1.msra.mxu0 0.0
        %1195 = vmatprep.subr.mxu0 0.0
        %1196 = vmatpush1.msra.mxu0 0.0
        %1197 = vmatprep.subr.mxu0 0.0
        %1198 = vmatpush1.msra.mxu0 0.0
        %1199 = vmatprep.subr.mxu0 0.0
        %1200 = vmatpush1.msra.mxu0 0.0
        %1201 = vmatprep.subr.mxu0 0.0
        %1202 = vmatpush1.msra.mxu0 0.0
        %1203 = vmatprep.subr.mxu0 0.0
        %1204 = vmatpush1.msra.mxu0 0.0
        %1205 = vmatprep.subr.mxu0 0.0
        %1206 = vmatpush1.msra.mxu0 0.0
        %1207 = vmatprep.subr.mxu0 0.0
        %1208 = vmatpush1.msra.mxu0 0.0
        %1209 = vmatprep.subr.mxu0 0.0
        %1210 = vmatpush1.msra.mxu0 0.0
        %1211 = vmatprep.subr.mxu0 0.0
        %1212 = vmatpush1.msra.mxu0 0.0
        %1213 = vmatprep.subr.mxu0 0.0
        %1214 = vmatpush1.msra.mxu0 0.0
        %1215 = vmatprep.subr.mxu0 0.0
        %1216 = vmatpush1.msra.mxu0 0.0
        %1217 = vmatprep.subr.mxu0 0.0
        %1218 = vmatpush1.msra.mxu0 0.0
        %1219 = vmatprep.subr.mxu0 0.0
        %1220 = vmatpush1.msra.mxu0 0.0
        %1221 = vmatprep.subr.mxu0 0.0
        %1222 = vmatpush1.msra.mxu0 0.0
        %1223 = vmatprep.subr.mxu0 0.0
        %1224 = vmatpush1.msra.mxu0 0.0
        %1225 = vmatprep.subr.mxu0 0.0
        %1226 = vmatpush1.msra.mxu0 0.0
        %1227 = vmatprep.subr.mxu0 0.0
        %1228 = vmatpush1.msra.mxu0 0.0
        %1229 = vmatprep.subr.mxu0 0.0
        %1230 = vmatpush1.msra.mxu0 0.0
        %1231 = vmatprep.mubr.f32.mxu0 0.0
        %1232 = vmatmul.mubr.f32.gmra.mrb[0].mxu0 %v1150
        %v1233 = vpop.f32.mrb[0].mxu0
        %v1234 = vadd.f32 0.0, %v1233
        %v1235 = vpop.f32.mrb[0].mxu0
        %v1236 = vadd.f32 0.0, %v1235
        %1237 = vmatprep.mubr.f32.mxu0 0.0
        %1238 = vmatmul.mubr.f32.gmra.mrb[0].mxu0 %v1153
        %v1239 = vpop.f32.mrb[0].mxu0
        %v1240 = vadd.f32 0.0, %v1239
        %v1241 = vpop.f32.mrb[0].mxu0
        %v1242 = vadd.f32 0.0, %v1241
        %1243 = vmatprep.mubr.f32.mxu0 0.0
        %1244 = vmatmul.mubr.f32.gmra.mrb[0].mxu0 %v1156
        %v1245 = vpop.f32.mrb[0].mxu0
        %v1246 = vadd.f32 0.0, %v1245
        %v1247 = vpop.f32.mrb[0].mxu0
        %v1248 = vadd.f32 0.0, %v1247
        %1249 = vmatprep.mubr.f32.mxu0 0.0
        %1250 = vmatmul.mubr.f32.gmra.mrb[0].mxu0 %v1159
        %v1251 = vpop.f32.mrb[0].mxu0
        %v1252 = vadd.f32 0.0, %v1251
        %v1253 = vpop.f32.mrb[0].mxu0
        %v1254 = vadd.f32 0.0, %v1253
        %1255 = vdwg.mxu0
        %v1256 = vadd.f32 %v1114, %v1234
        %v1257 = vadd.f32 %v1115, %v1236
        %v1258 = vadd.f32 %v1116, %v1240
        %v1259 = vadd.f32 %v1117, %v1242
        %v1260 = vadd.f32 %v1118, %v1246
        %v1261 = vadd.f32 %v1119, %v1248
        %v1262 = vadd.f32 %v1120, %v1252
        %v1263 = vadd.f32 %v1121, %v1254
        %vm1264 = vcmp.gt.f32.partialorder %v1256, 0.0
        %vm1265 = vcmp.gt.f32.partialorder %v1257, 0.0
        %vm1266 = vcmp.gt.f32.partialorder %v1258, 0.0
        %vm1267 = vcmp.gt.f32.partialorder %v1259, 0.0
        %vm1268 = vcmp.gt.f32.partialorder %v1260, 0.0
        %vm1269 = vcmp.gt.f32.partialorder %v1261, 0.0
        %vm1270 = vcmp.gt.f32.partialorder %v1262, 0.0
        %vm1271 = vcmp.gt.f32.partialorder %v1263, 0.0
        %v1272 = vmul.f32 %v1256, 0.01
        %v1273 = vmul.f32 %v1257, 0.01
        %v1274 = vmul.f32 %v1258, 0.01
        %v1275 = vmul.f32 %v1259, 0.01
        %v1276 = vmul.f32 %v1260, 0.01
        %v1277 = vmul.f32 %v1261, 0.01
        %v1278 = vmul.f32 %v1262, 0.01
        %v1279 = vmul.f32 %v1263, 0.01
        %v1280 = vsel %vm1264, %v1256, %v1272
        %v1281 = vsel %vm1265, %v1257, %v1273
        %v1282 = vsel %vm1266, %v1258, %v1274
        %v1283 = vsel %vm1267, %v1259, %v1275
        %v1284 = vsel %vm1268, %v1260, %v1276
        %v1285 = vsel %vm1269, %v1261, %v1277
        %v1286 = vsel %vm1270, %v1262, %v1278
        %v1287 = vsel %vm1271, %v1263, %v1279
        %v1288 = vld [vmem:[%s8] sm:$0xf]
        %v1289 = vld [vmem:[%s7] sm:$0xf]
        %1298 = vrot.lane.b32.xlu0 %v1280, 1
        %v1299 = vpop.permute.xlu0 %1298
        %1300 = vrot.lane.b32.xlu0 %v1281, 1
        %v1301 = vpop.permute.xlu0 %1300
        %1302 = vrot.lane.b32.xlu0 %v1282, 1
        %v1303 = vpop.permute.xlu0 %1302
        %1304 = vrot.lane.b32.xlu0 %v1283, 1
        %v1305 = vpop.permute.xlu0 %1304
        %1306 = vrot.lane.b32.xlu0 %v1284, 1
        %v1307 = vpop.permute.xlu0 %1306
        %1308 = vrot.lane.b32.xlu0 %v1285, 1
        %v1309 = vpop.permute.xlu0 %1308
        %1310 = vrot.lane.b32.xlu0 %v1286, 1
        %v1311 = vpop.permute.xlu0 %1310
        %1312 = vrot.lane.b32.xlu0 %v1287, 1
        %v1313 = vpop.permute.xlu0 %1312
        %v1314 = vsel %vm869, %v1299, %v1301
        %v1315 = vsel %vm869, %v1303, %v1305
        %v1316 = vsel %vm869, %v1307, %v1309
        %v1317 = vsel %vm869, %v1311, %v1313
        %v1326 = vsel %vm869, 0.0, %v1299
        %v1327 = vsel %vm869, 0.0, %v1303
        %v1328 = vsel %vm869, 0.0, %v1307
        %v1329 = vsel %vm869, 0.0, %v1311
        %v1330 = vsel %vm883, %v1326, 0.0
        %v1331 = vsel %vm884, %v1314, 0.0
        %v1332 = vsel %vm883, %v1327, 0.0
        %v1333 = vsel %vm884, %v1315, 0.0
        %v1334 = vsel %vm883, %v1328, 0.0
        %v1335 = vsel %vm884, %v1316, 0.0
        %v1336 = vsel %vm883, %v1329, 0.0
        %v1337 = vsel %vm884, %v1317, 0.0
        %vm1338 = vcmask 261120
        %v1340 = vsel %vm1338, %v1289, 0
        %1342 = vmatprep.subr.mxu0 %v1331
        %1343 = vmatpush1.msra.mxu0 %v1330
        %1344 = vmatprep.subr.mxu0 %v1333
        %1345 = vmatpush1.msra.mxu0 %v1332
        %1346 = vmatprep.subr.mxu0 %v1335
        %1347 = vmatpush1.msra.mxu0 %v1334
        %1348 = vmatprep.subr.mxu0 %v1337
        %1349 = vmatpush1.msra.mxu0 %v1336
        %1350 = vmatprep.subr.mxu0 0.0
        %1351 = vmatpush1.msra.mxu0 0.0
        %1352 = vmatprep.subr.mxu0 0.0
        %1353 = vmatpush1.msra.mxu0 0.0
        %1354 = vmatprep.subr.mxu0 0.0
        %1355 = vmatpush1.msra.mxu0 0.0
        %1356 = vmatprep.subr.mxu0 0.0
        %1357 = vmatpush1.msra.mxu0 0.0
        %1358 = vmatprep.subr.mxu0 0.0
        %1359 = vmatpush1.msra.mxu0 0.0
        %1360 = vmatprep.subr.mxu0 0.0
        %1361 = vmatpush1.msra.mxu0 0.0
        %1362 = vmatprep.subr.mxu0 0.0
        %1363 = vmatpush1.msra.mxu0 0.0
        %1364 = vmatprep.subr.mxu0 0.0
        %1365 = vmatpush1.msra.mxu0 0.0
        %1366 = vmatprep.subr.mxu0 0.0
        %1367 = vmatpush1.msra.mxu0 0.0
        %1368 = vmatprep.subr.mxu0 0.0
        %1369 = vmatpush1.msra.mxu0 0.0
        %1370 = vmatprep.subr.mxu0 0.0
        %1371 = vmatpush1.msra.mxu0 0.0
        %1372 = vmatprep.subr.mxu0 0.0
        %1373 = vmatpush1.msra.mxu0 0.0
        %1374 = vmatprep.subr.mxu0 0.0
        %1375 = vmatpush1.msra.mxu0 0.0
        %1376 = vmatprep.subr.mxu0 0.0
        %1377 = vmatpush1.msra.mxu0 0.0
        %1378 = vmatprep.subr.mxu0 0.0
        %1379 = vmatpush1.msra.mxu0 0.0
        %1380 = vmatprep.subr.mxu0 0.0
        %1381 = vmatpush1.msra.mxu0 0.0
        %1382 = vmatprep.subr.mxu0 0.0
        %1383 = vmatpush1.msra.mxu0 0.0
        %1384 = vmatprep.subr.mxu0 0.0
        %1385 = vmatpush1.msra.mxu0 0.0
        %1386 = vmatprep.subr.mxu0 0.0
        %1387 = vmatpush1.msra.mxu0 0.0
        %1388 = vmatprep.subr.mxu0 0.0
        %1389 = vmatpush1.msra.mxu0 0.0
        %1390 = vmatprep.subr.mxu0 0.0
        %1391 = vmatpush1.msra.mxu0 0.0
        %1392 = vmatprep.subr.mxu0 0.0
        %1393 = vmatpush1.msra.mxu0 0.0
        %1394 = vmatprep.subr.mxu0 0.0
        %1395 = vmatpush1.msra.mxu0 0.0
        %1396 = vmatprep.subr.mxu0 0.0
        %1397 = vmatpush1.msra.mxu0 0.0
        %1398 = vmatprep.subr.mxu0 0.0
        %1399 = vmatpush1.msra.mxu0 0.0
        %1400 = vmatprep.subr.mxu0 0.0
        %1401 = vmatpush1.msra.mxu0 0.0
        %1402 = vmatprep.subr.mxu0 0.0
        %1403 = vmatpush1.msra.mxu0 0.0
        %1404 = vmatprep.subr.mxu0 0.0
        %1405 = vmatpush1.msra.mxu0 0.0
        %1406 = vmatprep.mubr.f32.mxu0 0.0
        %1407 = vmatmul.mubr.f32.gmra.mrb[0].mxu0 %v1340
        %v1408 = vpop.f32.mrb[0].mxu0
        %v1409 = vadd.f32 0.0, %v1408
        %v1410 = vpop.f32.mrb[0].mxu0
        %v1411 = vadd.f32 0.0, %v1410
        %1412 = vdwg.mxu0
        %1414 = vset.pattern.permute.xlu0 0
        %1415 = vperm.xlu0 %1414, %v1288
        %v1416 = vpop.permute.xlu0 %1415
        %v1418 = vadd.f32 %v1416, %v1409
        %v1419 = vadd.f32 %v1416, %v1411
        %s1420 = scalar_lea.vmem %s7, 4
        %v1421 = vld [vmem:[%s1420] sm:$0xf]
        %v1423 = vsel %vm1338, %v1421, 0
        %1425 = vmatprep.subr.mxu0 %v1281
        %1426 = vmatpush1.msra.mxu0 %v1280
        %1427 = vmatprep.subr.mxu0 %v1283
        %1428 = vmatpush1.msra.mxu0 %v1282
        %1429 = vmatprep.subr.mxu0 %v1285
        %1430 = vmatpush1.msra.mxu0 %v1284
        %1431 = vmatprep.subr.mxu0 %v1287
        %1432 = vmatpush1.msra.mxu0 %v1286
        %1433 = vmatprep.subr.mxu0 0.0
        %1434 = vmatpush1.msra.mxu0 0.0
        %1435 = vmatprep.subr.mxu0 0.0
        %1436 = vmatpush1.msra.mxu0 0.0
        %1437 = vmatprep.subr.mxu0 0.0
        %1438 = vmatpush1.msra.mxu0 0.0
        %1439 = vmatprep.subr.mxu0 0.0
        %1440 = vmatpush1.msra.mxu0 0.0
        %1441 = vmatprep.subr.mxu0 0.0
        %1442 = vmatpush1.msra.mxu0 0.0
        %1443 = vmatprep.subr.mxu0 0.0
        %1444 = vmatpush1.msra.mxu0 0.0
        %1445 = vmatprep.subr.mxu0 0.0
        %1446 = vmatpush1.msra.mxu0 0.0
        %1447 = vmatprep.subr.mxu0 0.0
        %1448 = vmatpush1.msra.mxu0 0.0
        %1449 = vmatprep.subr.mxu0 0.0
        %1450 = vmatpush1.msra.mxu0 0.0
        %1451 = vmatprep.subr.mxu0 0.0
        %1452 = vmatpush1.msra.mxu0 0.0
        %1453 = vmatprep.subr.mxu0 0.0
        %1454 = vmatpush1.msra.mxu0 0.0
        %1455 = vmatprep.subr.mxu0 0.0
        %1456 = vmatpush1.msra.mxu0 0.0
        %1457 = vmatprep.subr.mxu0 0.0
        %1458 = vmatpush1.msra.mxu0 0.0
        %1459 = vmatprep.subr.mxu0 0.0
        %1460 = vmatpush1.msra.mxu0 0.0
        %1461 = vmatprep.subr.mxu0 0.0
        %1462 = vmatpush1.msra.mxu0 0.0
        %1463 = vmatprep.subr.mxu0 0.0
        %1464 = vmatpush1.msra.mxu0 0.0
        %1465 = vmatprep.subr.mxu0 0.0
        %1466 = vmatpush1.msra.mxu0 0.0
        %1467 = vmatprep.subr.mxu0 0.0
        %1468 = vmatpush1.msra.mxu0 0.0
        %1469 = vmatprep.subr.mxu0 0.0
        %1470 = vmatpush1.msra.mxu0 0.0
        %1471 = vmatprep.subr.mxu0 0.0
        %1472 = vmatpush1.msra.mxu0 0.0
        %1473 = vmatprep.subr.mxu0 0.0
        %1474 = vmatpush1.msra.mxu0 0.0
        %1475 = vmatprep.subr.mxu0 0.0
        %1476 = vmatpush1.msra.mxu0 0.0
        %1477 = vmatprep.subr.mxu0 0.0
        %1478 = vmatpush1.msra.mxu0 0.0
        %1479 = vmatprep.subr.mxu0 0.0
        %1480 = vmatpush1.msra.mxu0 0.0
        %1481 = vmatprep.subr.mxu0 0.0
        %1482 = vmatpush1.msra.mxu0 0.0
        %1483 = vmatprep.subr.mxu0 0.0
        %1484 = vmatpush1.msra.mxu0 0.0
        %1485 = vmatprep.subr.mxu0 0.0
        %1486 = vmatpush1.msra.mxu0 0.0
        %1487 = vmatprep.subr.mxu0 0.0
        %1488 = vmatpush1.msra.mxu0 0.0
        %1489 = vmatprep.mubr.f32.mxu0 0.0
        %1490 = vmatmul.mubr.f32.gmra.mrb[0].mxu0 %v1423
        %v1491 = vpop.f32.mrb[0].mxu0
        %v1492 = vadd.f32 0.0, %v1491
        %v1493 = vpop.f32.mrb[0].mxu0
        %v1494 = vadd.f32 0.0, %v1493
        %1495 = vdwg.mxu0
        %v1496 = vadd.f32 %v1418, %v1492
        %v1497 = vadd.f32 %v1419, %v1494
        %s1498 = scalar_lea.vmem %s7, 8
        %v1499 = vld [vmem:[%s1498] sm:$0xf]
        %1500 = vrot.lane.b32.xlu0 %v1280, 127
        %v1501 = vpop.permute.xlu0 %1500
        %1502 = vrot.lane.b32.xlu0 %v1281, 127
        %v1503 = vpop.permute.xlu0 %1502
        %1504 = vrot.lane.b32.xlu0 %v1282, 127
        %v1505 = vpop.permute.xlu0 %1504
        %1506 = vrot.lane.b32.xlu0 %v1283, 127
        %v1507 = vpop.permute.xlu0 %1506
        %1508 = vrot.lane.b32.xlu0 %v1284, 127
        %v1509 = vpop.permute.xlu0 %1508
        %1510 = vrot.lane.b32.xlu0 %v1285, 127
        %v1511 = vpop.permute.xlu0 %1510
        %1512 = vrot.lane.b32.xlu0 %v1286, 127
        %v1513 = vpop.permute.xlu0 %1512
        %1514 = vrot.lane.b32.xlu0 %v1287, 127
        %v1515 = vpop.permute.xlu0 %1514
        %v1516 = vsel %vm1131, %v1501, %v1503
        %v1517 = vsel %vm1131, %v1505, %v1507
        %v1518 = vsel %vm1131, %v1509, %v1511
        %v1519 = vsel %vm1131, %v1513, %v1515
        %v1528 = vsel %vm1131, %v1503, 0.0
        %v1529 = vsel %vm1131, %v1507, 0.0
        %v1530 = vsel %vm1131, %v1511, 0.0
        %v1531 = vsel %vm1131, %v1515, 0.0
        %v1532 = vsel %vm1145, %v1516, 0.0
        %v1533 = vsel %vm1146, %v1528, 0.0
        %v1534 = vsel %vm1145, %v1517, 0.0
        %v1535 = vsel %vm1146, %v1529, 0.0
        %v1536 = vsel %vm1145, %v1518, 0.0
        %v1537 = vsel %vm1146, %v1530, 0.0
        %v1538 = vsel %vm1145, %v1519, 0.0
        %v1539 = vsel %vm1146, %v1531, 0.0
        %v1541 = vsel %vm1338, %v1499, 0
        %1543 = vmatprep.subr.mxu0 %v1533
        %1544 = vmatpush1.msra.mxu0 %v1532
        %1545 = vmatprep.subr.mxu0 %v1535
        %1546 = vmatpush1.msra.mxu0 %v1534
        %1547 = vmatprep.subr.mxu0 %v1537
        %1548 = vmatpush1.msra.mxu0 %v1536
        %1549 = vmatprep.subr.mxu0 %v1539
        %1550 = vmatpush1.msra.mxu0 %v1538
        %1551 = vmatprep.subr.mxu0 0.0
        %1552 = vmatpush1.msra.mxu0 0.0
        %1553 = vmatprep.subr.mxu0 0.0
        %1554 = vmatpush1.msra.mxu0 0.0
        %1555 = vmatprep.subr.mxu0 0.0
        %1556 = vmatpush1.msra.mxu0 0.0
        %1557 = vmatprep.subr.mxu0 0.0
        %1558 = vmatpush1.msra.mxu0 0.0
        %1559 = vmatprep.subr.mxu0 0.0
        %1560 = vmatpush1.msra.mxu0 0.0
        %1561 = vmatprep.subr.mxu0 0.0
        %1562 = vmatpush1.msra.mxu0 0.0
        %1563 = vmatprep.subr.mxu0 0.0
        %1564 = vmatpush1.msra.mxu0 0.0
        %1565 = vmatprep.subr.mxu0 0.0
        %1566 = vmatpush1.msra.mxu0 0.0
        %1567 = vmatprep.subr.mxu0 0.0
        %1568 = vmatpush1.msra.mxu0 0.0
        %1569 = vmatprep.subr.mxu0 0.0
        %1570 = vmatpush1.msra.mxu0 0.0
        %1571 = vmatprep.subr.mxu0 0.0
        %1572 = vmatpush1.msra.mxu0 0.0
        %1573 = vmatprep.subr.mxu0 0.0
        %1574 = vmatpush1.msra.mxu0 0.0
        %1575 = vmatprep.subr.mxu0 0.0
        %1576 = vmatpush1.msra.mxu0 0.0
        %1577 = vmatprep.subr.mxu0 0.0
        %1578 = vmatpush1.msra.mxu0 0.0
        %1579 = vmatprep.subr.mxu0 0.0
        %1580 = vmatpush1.msra.mxu0 0.0
        %1581 = vmatprep.subr.mxu0 0.0
        %1582 = vmatpush1.msra.mxu0 0.0
        %1583 = vmatprep.subr.mxu0 0.0
        %1584 = vmatpush1.msra.mxu0 0.0
        %1585 = vmatprep.subr.mxu0 0.0
        %1586 = vmatpush1.msra.mxu0 0.0
        %1587 = vmatprep.subr.mxu0 0.0
        %1588 = vmatpush1.msra.mxu0 0.0
        %1589 = vmatprep.subr.mxu0 0.0
        %1590 = vmatpush1.msra.mxu0 0.0
        %1591 = vmatprep.subr.mxu0 0.0
        %1592 = vmatpush1.msra.mxu0 0.0
        %1593 = vmatprep.subr.mxu0 0.0
        %1594 = vmatpush1.msra.mxu0 0.0
        %1595 = vmatprep.subr.mxu0 0.0
        %1596 = vmatpush1.msra.mxu0 0.0
        %1597 = vmatprep.subr.mxu0 0.0
        %1598 = vmatpush1.msra.mxu0 0.0
        %1599 = vmatprep.subr.mxu0 0.0
        %1600 = vmatpush1.msra.mxu0 0.0
        %1601 = vmatprep.subr.mxu0 0.0
        %1602 = vmatpush1.msra.mxu0 0.0
        %1603 = vmatprep.subr.mxu0 0.0
        %1604 = vmatpush1.msra.mxu0 0.0
        %1605 = vmatprep.subr.mxu0 0.0
        %1606 = vmatpush1.msra.mxu0 0.0
        %1607 = vmatprep.mubr.f32.mxu0 0.0
        %1608 = vmatmul.mubr.f32.gmra.mrb[0].mxu0 %v1541
        %v1609 = vpop.f32.mrb[0].mxu0
        %v1610 = vadd.f32 0.0, %v1609
        %v1611 = vpop.f32.mrb[0].mxu0
        %v1612 = vadd.f32 0.0, %v1611
        %1613 = vdwg.mxu0
        %v1614 = vadd.f32 %v1496, %v1610
        %v1615 = vadd.f32 %v1497, %v1612
        %v1616 = vld [vmem:[#allocation2] sm:$0xff]
        %v1617 = vadd.f32 %v834, %v1616
        %v1620 = vcombine.low %v1614, %v1615
        %v1622 = vadd.f32 %v1617, %v1620
        %1623 = vst [vmem:[%s350] sm:$0xff] %v1622
        %s1624 = sand.u32 %s241, 1
        %s1625 = scalar_lea.sflag [#allocation5], %s1624
        %s1626 = sand.u32 %s241, 1
        %s1627 = smul.addr %s1626, 8
        %s1628 = scalar_lea.vmem [#allocation4], %s1627
        // Predicated region
        $region61: #{tpu_custom_call.1} parent=55 // pred_check
          %p1629 = pneg %p251
        $region62: #{tpu_custom_call.1} parent=55 // pred_check_branch
          %1631 = sbr.rel (%p1629) target = $region64
        $region63: #{tpu_custom_call.1} parent=55 // pred_region
          %s1632 = smul.u32 2, %s27
          %s1634 = ssub.s32 128, 128
          %1635 = vsyncadd %s1625, %s1634
          %s1636 = smul.addr %s28, 2
          %s1637 = sadd.s32 %s1632, %s1636
          %s1638 = smul.addr %s1637, 64
          %s1639 = scalar_lea.hbm %s9, %s1638
          %s1641 = sshll.u32 %s1628, 4
          %s1642 = int_to_ptr.vmem [resolvable:$true] %s1641
          %1644 = dma.vmem_to_hbm [thread:$0]  %s1642, 128, %s1639, %s1625
        $region64: #{tpu_custom_call.1} parent=55 // pred_fallthru
          _
      $region56: #{tpu_custom_call.1} parent=5 // pred_fallthru
        _
      %p1645 = scmp.le.s32.totalorder 2, %s18
      // Predicated region
      $region65: #{tpu_custom_call.1} parent=5 // pred_check
        %p1646 = pneg %p1645
      $region66: #{tpu_custom_call.1} parent=5 // pred_check_branch
        %1648 = sbr.rel (%p1646) target = $region68
      $region67: #{tpu_custom_call.1} parent=5 // pred_region
        %s1649 = ssub.s32 %s18, 2
        // Predicated region
        $region69: #{tpu_custom_call.1} parent=67 // pred_check
          %p1650 = pneg %p257
        $region70: #{tpu_custom_call.1} parent=67 // pred_check_branch
          %1652 = sbr.rel (%p1650) target = $region72
        $region71: #{tpu_custom_call.1} parent=67 // pred_region
          %s1653 = sand.u32 %s242, 1
          %s1654 = scalar_lea.sflag [#allocation5], %s1653
          %s1655 = sand.u32 %s242, 1
          %s1656 = smul.addr %s1655, 8
          %s1657 = scalar_lea.vmem [#allocation4], %s1656
          %1658 = dma.done %s1654, 128
        $region72: #{tpu_custom_call.1} parent=67 // pred_fallthru
          _
      $region68: #{tpu_custom_call.1} parent=5 // pred_fallthru
        _
    $region6: #{tpu_custom_call.1} parent=1 // loop_footer
      %s22 = sadd.s32 1, %s18
    $region7: #{tpu_custom_call.1} parent=1 // loop_footer_branch
      %17 = sbr.rel target = $region3
    $region8: #{tpu_custom_call.1} parent=1 // loop_exit
      _
    %1659 = vsyncpa [#allocation5], 1
    %s1660 = scalar_lea.sflag [#allocation5], 1
    %1661 = vsyncpa %s1660, 1

</llo_original>
